<compile_context>
chip_gen: v7x
topology: tpu7x:2x2x1
jax: 0.10.0
libtpu: 0.0.40
codegen_flags: <defaults>
</compile_context>

<pallas_src>
import functools
import numpy as np

import jax
import jax.numpy as jnp
from jax import lax
from jax.experimental import pallas as pl
from jax.experimental.pallas import tpu as pltpu


# ---------------------------------------------------------------------------
# Pallas kernel: stride-1 "same" conv + bias via implicit im2col.
# Input block:  (NB, Ho+2p, Wo+2p, Cin)  padded pooled activations (VMEM)
# Weight block: (kh*kw, Cin, Cout)
# Bias block:   (1, Cout)
# Output block: (NB*Ho*Wo, Cout)
# ---------------------------------------------------------------------------
def _conv_bias_kernel(x_ref, w_ref, b_ref, o_ref, *, kh, kw, out_h, out_w):
    nb = x_ref.shape[0]
    cin = x_ref.shape[3]
    m, cout = o_ref.shape                      # m == nb * out_h * out_w

    acc = jnp.zeros((m, cout), jnp.float32)
    # Unrolled tap loop == reduction over the kh*kw filter offsets.  Each tap
    # is a shifted window of the VMEM-resident padded block -> one MXU matmul.
    for t in range(kh * kw):
        di, dj = t // kw, t % kw
        win = x_ref[:, di:di + out_h, dj:dj + out_w, :]       # (nb, Ho, Wo, Cin)
        lhs = win.reshape(m, cin)                             # collapse leading dims
        acc = acc + jnp.dot(lhs, w_ref[t], preferred_element_type=jnp.float32)

    o_ref[...] = acc + b_ref[...]                             # fused bias epilogue


def pallas_conv2d_same(x, w, b, *, batch_block=None, vmem_budget_bytes=4 * 1024 * 1024):
    """NHWC stride-1 'same' conv: x (N,H,W,Cin), w (kh,kw,Cin,Cout), b (Cout,)."""
    n, h, wd, cin = x.shape
    kh, kw, _, cout = w.shape
    pad_h, pad_w = kh // 2, kw // 2
    hp, wp = h + 2 * pad_h, wd + 2 * pad_w

    if batch_block is None:
        # Largest batch block whose (double-buffered) input + output tiles stay
        # well inside a conservative VMEM budget (safe on v7x's 64 MiB too).
        per_sample = 2 * 4 * (hp * wp * cin + h * wd * cout)
        batch_block = max(1, min(n, vmem_budget_bytes // max(per_sample, 1)))
        while n % batch_block:
            batch_block -= 1
    nb = batch_block
    m_block = nb * h * wd

    # Thin JAX glue: zero-pad the (already pooled, 4x-smaller) activations.
    xp = jnp.pad(x, ((0, 0), (pad_h, pad_h), (pad_w, pad_w), (0, 0)))
    wk = w.reshape(kh * kw, cin, cout).astype(jnp.float32)
    bias = b.reshape(1, cout).astype(jnp.float32)

    kernel = functools.partial(_conv_bias_kernel, kh=kh, kw=kw, out_h=h, out_w=wd)
    out2d = pl.pallas_call(
        kernel,
        out_shape=jax.ShapeDtypeStruct((n * h * wd, cout), jnp.float32),
        grid=(n // nb,),
        in_specs=[
            pl.BlockSpec((nb, hp, wp, cin), lambda i: (i, 0, 0, 0)),
            pl.BlockSpec((kh * kw, cin, cout), lambda i: (0, 0, 0)),
            pl.BlockSpec((1, cout), lambda i: (0, 0)),
        ],
        out_specs=pl.BlockSpec((m_block, cout), lambda i: (i, 0)),
        compiler_params=pltpu.CompilerParams(
            dimension_semantics=("parallel",),
        ),
    )(xp, wk, bias)
    # Free (metadata-only) reshape back to NHWC.
    return out2d.reshape(n, h, wd, cout)


# ---------------------------------------------------------------------------
# MeanPoolConv forward
# ---------------------------------------------------------------------------
def mean_pool_2x2(x_nhwc):
    # TODO(synk): 2x2 mean pool kept as a single strided-add JAX glue pass; the
    # conv (the hot path) is the Pallas kernel and consumes the pooled tensor.
    return (x_nhwc[:, ::2, ::2, :] + x_nhwc[:, 1::2, ::2, :]
            + x_nhwc[:, ::2, 1::2, :] + x_nhwc[:, 1::2, 1::2, :]) * 0.25


def mean_pool_conv(params, x_nchw):
    """MeanPoolConv.forward: pool -> conv.  x_nchw: (N, Cin, H, W) float32."""
    x = jnp.transpose(x_nchw, (0, 2, 3, 1))          # NCHW -> NHWC (C on lanes)
    pooled = mean_pool_2x2(x)
    out = pallas_conv2d_same(pooled, params["w"], params["b"])
    return jnp.transpose(out, (0, 3, 1, 2))          # back to NCHW


# ---------------------------------------------------------------------------
# Parameter init (PyTorch Conv2d default: uniform(-1/sqrt(fan_in), +1/sqrt(fan_in)))
# ---------------------------------------------------------------------------
def init_mean_pool_conv(key, input_dim, output_dim, kernel_size=3, biases=True):
    fan_in = input_dim * kernel_size * kernel_size
    bound = 1.0 / np.sqrt(fan_in)
    kw_, kb_ = jax.random.split(key)
    w = jax.random.uniform(kw_, (kernel_size, kernel_size, input_dim, output_dim),
                           jnp.float32, -bound, bound)
    if biases:
        b = jax.random.uniform(kb_, (output_dim,), jnp.float32, -bound, bound)
    else:
        b = jnp.zeros((output_dim,), jnp.float32)
    return {"w": w, "b": b}


# ---------------------------------------------------------------------------
# Pure-JAX reference (for a correctness check)
# ---------------------------------------------------------------------------
def reference_mean_pool_conv(params, x_nchw):
    x = jnp.transpose(x_nchw, (0, 2, 3, 1))
    pooled = mean_pool_2x2(x)
    out = lax.conv_general_dilated(
        pooled, params["w"], window_strides=(1, 1), padding="SAME",
        dimension_numbers=("NHWC", "HWIO", "NHWC"))
    out = out + params["b"][None, None, None, :]
    return jnp.transpose(out, (0, 3, 1, 2))


# ---------------------------------------------------------------------------
if __name__ == "__main__":
    key = jax.random.PRNGKey(0)
    k_param, k_x = jax.random.split(key)

    # Small shapes consistent with the module: batch=2, channels=4, spatial=16.
    N, Cin, H, W = 2, 4, 16, 16
    Cout = 32

    params = init_mean_pool_conv(k_param, Cin, Cout, kernel_size=3, biases=True)
    x = jax.random.normal(k_x, (N, Cin, H, W), jnp.float32)

    fwd = jax.jit(mean_pool_conv)
    out = jax.block_until_ready(fwd(params, x))

    assert out.shape == (N, Cout, H // 2, W // 2), out.shape
    assert bool(jnp.all(jnp.isfinite(out)))

    ref = jax.block_until_ready(jax.jit(reference_mean_pool_conv)(params, x))
    max_err = float(jnp.max(jnp.abs(out - ref)))
    assert bool(jnp.allclose(out, ref, rtol=1e-3, atol=1e-3)), max_err

    print("KERNEL_OK")
</pallas_src>

<mosaic_0001>
module attributes {stable_mosaic.version = 11 : i64} {
  func.func @_conv_bias_kernel(%arg0: i32, %arg1: memref<2x10x10x4xf32, #tpu.memory_space<vmem>>, %arg2: memref<9x4x32xf32, #tpu.memory_space<vmem>>, %arg3: memref<1x32xf32, #tpu.memory_space<vmem>>, %arg4: memref<128x32xf32, #tpu.memory_space<vmem>>) attributes {dimension_semantics = [#tpu.dimension_semantics<parallel>], iteration_bounds = array<i64: 1>, scalar_prefetch = 0 : i64, scratch_operands = 0 : i64, tpu.core_type = #tpu.core_type<tc>, window_params = [{transform_indices = @transform_0, window_bounds = array<i64: 2, 10, 10, 4>}, {pipeline_mode = #tpu.pipeline_mode<synchronous>, transform_indices = @transform_1, window_bounds = array<i64: 9, 4, 32>}, {pipeline_mode = #tpu.pipeline_mode<synchronous>, transform_indices = @transform_2, window_bounds = array<i64: 1, 32>}, {transform_indices = @transform_3, window_bounds = array<i64: 128, 32>}]} {
    %cst = arith.constant 0.000000e+00 : f32
    %0 = vector.broadcast %cst : f32 to vector<128x32xf32>
    %c0 = arith.constant 0 : index
    %c0_0 = arith.constant 0 : index
    %c0_1 = arith.constant 0 : index
    %c0_2 = arith.constant 0 : index
    %1 = vector.load %arg1[%c0, %c0_0, %c0_1, %c0_2] : memref<2x10x10x4xf32, #tpu.memory_space<vmem>>, vector<2x8x8x4xf32>
    %2 = vector.shape_cast %1 : vector<2x8x8x4xf32> to vector<128x4xf32>
    %c0_3 = arith.constant 0 : index
    %c0_4 = arith.constant 0 : index
    %c0_5 = arith.constant 0 : index
    %3 = vector.load %arg2[%c0_3, %c0_4, %c0_5] : memref<9x4x32xf32, #tpu.memory_space<vmem>>, vector<1x4x32xf32>
    %4 = vector.shape_cast %3 : vector<1x4x32xf32> to vector<4x32xf32>
    %cst_6 = arith.constant dense<0.000000e+00> : vector<128x32xf32>
    %5 = tpu.matmul %2, %4, %cst_6 {dimension_numbers = #tpu.dot_dimension_numbers<[1], [0], [0], [1], [0, 0, 1, 1], [], []>} : vector<128x4xf32>, vector<4x32xf32>, vector<128x32xf32> -> vector<128x32xf32>
    %6 = arith.addf %0, %5 : vector<128x32xf32>
    %c0_7 = arith.constant 0 : index
    %c0_8 = arith.constant 0 : index
    %c1 = arith.constant 1 : index
    %c0_9 = arith.constant 0 : index
    %7 = vector.load %arg1[%c0_7, %c0_8, %c1, %c0_9] : memref<2x10x10x4xf32, #tpu.memory_space<vmem>>, vector<2x8x8x4xf32>
    %8 = vector.shape_cast %7 : vector<2x8x8x4xf32> to vector<128x4xf32>
    %c1_10 = arith.constant 1 : index
    %c0_11 = arith.constant 0 : index
    %c0_12 = arith.constant 0 : index
    %9 = vector.load %arg2[%c1_10, %c0_11, %c0_12] : memref<9x4x32xf32, #tpu.memory_space<vmem>>, vector<1x4x32xf32>
    %10 = vector.shape_cast %9 : vector<1x4x32xf32> to vector<4x32xf32>
    %cst_13 = arith.constant dense<0.000000e+00> : vector<128x32xf32>
    %11 = tpu.matmul %8, %10, %cst_13 {dimension_numbers = #tpu.dot_dimension_numbers<[1], [0], [0], [1], [0, 0, 1, 1], [], []>} : vector<128x4xf32>, vector<4x32xf32>, vector<128x32xf32> -> vector<128x32xf32>
    %12 = arith.addf %6, %11 : vector<128x32xf32>
    %c0_14 = arith.constant 0 : index
    %c0_15 = arith.constant 0 : index
    %c2 = arith.constant 2 : index
    %c0_16 = arith.constant 0 : index
    %13 = vector.load %arg1[%c0_14, %c0_15, %c2, %c0_16] : memref<2x10x10x4xf32, #tpu.memory_space<vmem>>, vector<2x8x8x4xf32>
    %14 = vector.shape_cast %13 : vector<2x8x8x4xf32> to vector<128x4xf32>
    %c2_17 = arith.constant 2 : index
    %c0_18 = arith.constant 0 : index
    %c0_19 = arith.constant 0 : index
    %15 = vector.load %arg2[%c2_17, %c0_18, %c0_19] : memref<9x4x32xf32, #tpu.memory_space<vmem>>, vector<1x4x32xf32>
    %16 = vector.shape_cast %15 : vector<1x4x32xf32> to vector<4x32xf32>
    %cst_20 = arith.constant dense<0.000000e+00> : vector<128x32xf32>
    %17 = tpu.matmul %14, %16, %cst_20 {dimension_numbers = #tpu.dot_dimension_numbers<[1], [0], [0], [1], [0, 0, 1, 1], [], []>} : vector<128x4xf32>, vector<4x32xf32>, vector<128x32xf32> -> vector<128x32xf32>
    %18 = arith.addf %12, %17 : vector<128x32xf32>
    %c0_21 = arith.constant 0 : index
    %c1_22 = arith.constant 1 : index
    %c0_23 = arith.constant 0 : index
    %c0_24 = arith.constant 0 : index
    %19 = vector.load %arg1[%c0_21, %c1_22, %c0_23, %c0_24] : memref<2x10x10x4xf32, #tpu.memory_space<vmem>>, vector<2x8x8x4xf32>
    %20 = vector.shape_cast %19 : vector<2x8x8x4xf32> to vector<128x4xf32>
    %c3 = arith.constant 3 : index
    %c0_25 = arith.constant 0 : index
    %c0_26 = arith.constant 0 : index
    %21 = vector.load %arg2[%c3, %c0_25, %c0_26] : memref<9x4x32xf32, #tpu.memory_space<vmem>>, vector<1x4x32xf32>
    %22 = vector.shape_cast %21 : vector<1x4x32xf32> to vector<4x32xf32>
    %cst_27 = arith.constant dense<0.000000e+00> : vector<128x32xf32>
    %23 = tpu.matmul %20, %22, %cst_27 {dimension_numbers = #tpu.dot_dimension_numbers<[1], [0], [0], [1], [0, 0, 1, 1], [], []>} : vector<128x4xf32>, vector<4x32xf32>, vector<128x32xf32> -> vector<128x32xf32>
    %24 = arith.addf %18, %23 : vector<128x32xf32>
    %c0_28 = arith.constant 0 : index
    %c1_29 = arith.constant 1 : index
    %c1_30 = arith.constant 1 : index
    %c0_31 = arith.constant 0 : index
    %25 = vector.load %arg1[%c0_28, %c1_29, %c1_30, %c0_31] : memref<2x10x10x4xf32, #tpu.memory_space<vmem>>, vector<2x8x8x4xf32>
    %26 = vector.shape_cast %25 : vector<2x8x8x4xf32> to vector<128x4xf32>
    %c4 = arith.constant 4 : index
    %c0_32 = arith.constant 0 : index
    %c0_33 = arith.constant 0 : index
    %27 = vector.load %arg2[%c4, %c0_32, %c0_33] : memref<9x4x32xf32, #tpu.memory_space<vmem>>, vector<1x4x32xf32>
    %28 = vector.shape_cast %27 : vector<1x4x32xf32> to vector<4x32xf32>
    %cst_34 = arith.constant dense<0.000000e+00> : vector<128x32xf32>
    %29 = tpu.matmul %26, %28, %cst_34 {dimension_numbers = #tpu.dot_dimension_numbers<[1], [0], [0], [1], [0, 0, 1, 1], [], []>} : vector<128x4xf32>, vector<4x32xf32>, vector<128x32xf32> -> vector<128x32xf32>
    %30 = arith.addf %24, %29 : vector<128x32xf32>
    %c0_35 = arith.constant 0 : index
    %c1_36 = arith.constant 1 : index
    %c2_37 = arith.constant 2 : index
    %c0_38 = arith.constant 0 : index
    %31 = vector.load %arg1[%c0_35, %c1_36, %c2_37, %c0_38] : memref<2x10x10x4xf32, #tpu.memory_space<vmem>>, vector<2x8x8x4xf32>
    %32 = vector.shape_cast %31 : vector<2x8x8x4xf32> to vector<128x4xf32>
    %c5 = arith.constant 5 : index
    %c0_39 = arith.constant 0 : index
    %c0_40 = arith.constant 0 : index
    %33 = vector.load %arg2[%c5, %c0_39, %c0_40] : memref<9x4x32xf32, #tpu.memory_space<vmem>>, vector<1x4x32xf32>
    %34 = vector.shape_cast %33 : vector<1x4x32xf32> to vector<4x32xf32>
    %cst_41 = arith.constant dense<0.000000e+00> : vector<128x32xf32>
    %35 = tpu.matmul %32, %34, %cst_41 {dimension_numbers = #tpu.dot_dimension_numbers<[1], [0], [0], [1], [0, 0, 1, 1], [], []>} : vector<128x4xf32>, vector<4x32xf32>, vector<128x32xf32> -> vector<128x32xf32>
    %36 = arith.addf %30, %35 : vector<128x32xf32>
    %c0_42 = arith.constant 0 : index
    %c2_43 = arith.constant 2 : index
    %c0_44 = arith.constant 0 : index
    %c0_45 = arith.constant 0 : index
    %37 = vector.load %arg1[%c0_42, %c2_43, %c0_44, %c0_45] : memref<2x10x10x4xf32, #tpu.memory_space<vmem>>, vector<2x8x8x4xf32>
    %38 = vector.shape_cast %37 : vector<2x8x8x4xf32> to vector<128x4xf32>
    %c6 = arith.constant 6 : index
    %c0_46 = arith.constant 0 : index
    %c0_47 = arith.constant 0 : index
    %39 = vector.load %arg2[%c6, %c0_46, %c0_47] : memref<9x4x32xf32, #tpu.memory_space<vmem>>, vector<1x4x32xf32>
    %40 = vector.shape_cast %39 : vector<1x4x32xf32> to vector<4x32xf32>
    %cst_48 = arith.constant dense<0.000000e+00> : vector<128x32xf32>
    %41 = tpu.matmul %38, %40, %cst_48 {dimension_numbers = #tpu.dot_dimension_numbers<[1], [0], [0], [1], [0, 0, 1, 1], [], []>} : vector<128x4xf32>, vector<4x32xf32>, vector<128x32xf32> -> vector<128x32xf32>
    %42 = arith.addf %36, %41 : vector<128x32xf32>
    %c0_49 = arith.constant 0 : index
    %c2_50 = arith.constant 2 : index
    %c1_51 = arith.constant 1 : index
    %c0_52 = arith.constant 0 : index
    %43 = vector.load %arg1[%c0_49, %c2_50, %c1_51, %c0_52] : memref<2x10x10x4xf32, #tpu.memory_space<vmem>>, vector<2x8x8x4xf32>
    %44 = vector.shape_cast %43 : vector<2x8x8x4xf32> to vector<128x4xf32>
    %c7 = arith.constant 7 : index
    %c0_53 = arith.constant 0 : index
    %c0_54 = arith.constant 0 : index
    %45 = vector.load %arg2[%c7, %c0_53, %c0_54] : memref<9x4x32xf32, #tpu.memory_space<vmem>>, vector<1x4x32xf32>
    %46 = vector.shape_cast %45 : vector<1x4x32xf32> to vector<4x32xf32>
    %cst_55 = arith.constant dense<0.000000e+00> : vector<128x32xf32>
    %47 = tpu.matmul %44, %46, %cst_55 {dimension_numbers = #tpu.dot_dimension_numbers<[1], [0], [0], [1], [0, 0, 1, 1], [], []>} : vector<128x4xf32>, vector<4x32xf32>, vector<128x32xf32> -> vector<128x32xf32>
    %48 = arith.addf %42, %47 : vector<128x32xf32>
    %c0_56 = arith.constant 0 : index
    %c2_57 = arith.constant 2 : index
    %c2_58 = arith.constant 2 : index
    %c0_59 = arith.constant 0 : index
    %49 = vector.load %arg1[%c0_56, %c2_57, %c2_58, %c0_59] : memref<2x10x10x4xf32, #tpu.memory_space<vmem>>, vector<2x8x8x4xf32>
    %50 = vector.shape_cast %49 : vector<2x8x8x4xf32> to vector<128x4xf32>
    %c8 = arith.constant 8 : index
    %c0_60 = arith.constant 0 : index
    %c0_61 = arith.constant 0 : index
    %51 = vector.load %arg2[%c8, %c0_60, %c0_61] : memref<9x4x32xf32, #tpu.memory_space<vmem>>, vector<1x4x32xf32>
    %52 = vector.shape_cast %51 : vector<1x4x32xf32> to vector<4x32xf32>
    %cst_62 = arith.constant dense<0.000000e+00> : vector<128x32xf32>
    %53 = tpu.matmul %50, %52, %cst_62 {dimension_numbers = #tpu.dot_dimension_numbers<[1], [0], [0], [1], [0, 0, 1, 1], [], []>} : vector<128x4xf32>, vector<4x32xf32>, vector<128x32xf32> -> vector<128x32xf32>
    %54 = arith.addf %48, %53 : vector<128x32xf32>
    %c0_63 = arith.constant 0 : index
    %c0_64 = arith.constant 0 : index
    %55 = vector.load %arg3[%c0_63, %c0_64] : memref<1x32xf32, #tpu.memory_space<vmem>>, vector<1x32xf32>
    %56 = vector.broadcast %55 : vector<1x32xf32> to vector<128x32xf32>
    %57 = arith.addf %54, %56 : vector<128x32xf32>
    %c0_65 = arith.constant 0 : index
    %c0_66 = arith.constant 0 : index
    %58 = vector.load %arg4[%c0_65, %c0_66] : memref<128x32xf32, #tpu.memory_space<vmem>>, vector<128x32xf32>
    tpu.vector_store %arg4[%c0_65, %c0_66], %57 {strides = array<i32>} : memref<128x32xf32, #tpu.memory_space<vmem>>, vector<128x32xf32>,
    return
  }
  func.func @transform_0(%arg0: i32) -> (i32, i32, i32, i32) {
    %c0_i32 = arith.constant 0 : i32
    %c0_i32_0 = arith.constant 0 : i32
    %c0_i32_1 = arith.constant 0 : i32
    %c0_i32_2 = arith.constant 0 : i32
    return %arg0, %c0_i32, %c0_i32_0, %c0_i32_1 : i32, i32, i32, i32
  }
  func.func @transform_1(%arg0: i32) -> (i32, i32, i32) {
    %c0_i32 = arith.constant 0 : i32
    %c0_i32_0 = arith.constant 0 : i32
    %c0_i32_1 = arith.constant 0 : i32
    %c0_i32_2 = arith.constant 0 : i32
    return %c0_i32, %c0_i32_0, %c0_i32_1 : i32, i32, i32
  }
  func.func @transform_2(%arg0: i32) -> (i32, i32) {
    %c0_i32 = arith.constant 0 : i32
    %c0_i32_0 = arith.constant 0 : i32
    %c0_i32_1 = arith.constant 0 : i32
    return %c0_i32, %c0_i32_0 : i32, i32
  }
  func.func @transform_3(%arg0: i32) -> (i32, i32) {
    %c0_i32 = arith.constant 0 : i32
    %c0_i32_0 = arith.constant 0 : i32
    return %arg0, %c0_i32 : i32, i32
  }
}

</mosaic_0001>

<llo_original>
// kernel: mean_pool_conv.1
$region0: #{mean_pool_conv.1}
  #allocation0 [shape = 'u32[]', space=smem, size = 0x4, offset = 0x4, fixed_abs, tag = 'smem constant byte address 0x4 - core index']
  #allocation1 [shape = 'u32[144,128]{1,0:T(1,128)}', space=vmem, size = 0x12000, scoped, tag = 'internal scratch']
  %s0 = inlined_call_operand.vmem [shape: f32[2,10,10,4], index: 0, kind: input, shape index: {}]
  %s1 = inlined_call_operand.vmem [shape: f32[9,4,32], index: 1, kind: input, shape index: {}]
  %s2 = inlined_call_operand.vmem [shape: f32[1,32], index: 2, kind: input, shape index: {}]
  %s3 = inlined_call_operand.hbm [shape: f32[128,32], index: 3, kind: output, shape index: {}]
  %s4 = sld [smem:[#allocation0]]
  $region22: #{mean_pool_conv.1} parent=0
    _
  %s6 = ssub.s32 1, %s4
  %s7 = scalar_select 0, %s6, %s4
  $region1: #{mean_pool_conv.1} parent=0
    #allocation2 [shape = 'u8[65536]{0}', space=vmem, size = 0x10000, scoped, tag = 'output window, operand 0, single buffered']
    #allocation3 [shape = 's32[1]{0}', space=sflag, size = 0x4, scoped, tag = 'scoped memory for mean_pool_conv.1']
    %8 = vsyncpa [#allocation3], 0
    // Predicated region
    $region2: #{mean_pool_conv.1} parent=1 // pred_check
      _
    $region3: #{mean_pool_conv.1} parent=1 // pred_check_branch
      %10 = sbr.rel (0) target = $region5
    $region4: #{mean_pool_conv.1} parent=1 // pred_region
      _
    $region5: #{mean_pool_conv.1} parent=1 // pred_fallthru
      _
    // Predicated region
    $region6: #{mean_pool_conv.1} parent=1 // pred_check
      _
    $region7: #{mean_pool_conv.1} parent=1 // pred_check_branch
      %12 = sbr.rel (0) target = $region9
    $region8: #{mean_pool_conv.1} parent=1 // pred_region
      _
    $region9: #{mean_pool_conv.1} parent=1 // pred_fallthru
      _
    // Predicated region
    $region10: #{mean_pool_conv.1} parent=1 // pred_check
      _
    $region11: #{mean_pool_conv.1} parent=1 // pred_check_branch
      %14 = sbr.rel (0) target = $region13
    $region12: #{mean_pool_conv.1} parent=1 // pred_region
      _
    $region13: #{mean_pool_conv.1} parent=1 // pred_fallthru
      _
    %v15 = vld [vmem:[%s0] sm:$0xff]
    %v16 = vld [vmem:[%s0 + $0x10] sm:$0xff]
    %v17 = vld [vmem:[%s0 + $0x20] sm:$0xff]
    %v18 = vld [vmem:[%s0 + $0x30] sm:$0xff]
    %v19 = vld [vmem:[%s0 + $0x40] sm:$0xff]
    %v20 = vld [vmem:[%s0 + $0x50] sm:$0xff]
    %v21 = vld [vmem:[%s0 + $0x60] sm:$0xff]
    %v22 = vld [vmem:[%s0 + $0x70] sm:$0xff]
    %v23 = vld [vmem:[%s0 + $0xa0] sm:$0xff]
    %v24 = vld [vmem:[%s0 + $0xb0] sm:$0xff]
    %v25 = vld [vmem:[%s0 + $0xc0] sm:$0xff]
    %v26 = vld [vmem:[%s0 + $0xd0] sm:$0xff]
    %v27 = vld [vmem:[%s0 + $0xe0] sm:$0xff]
    %v28 = vld [vmem:[%s0 + $0xf0] sm:$0xff]
    %v29 = vld [vmem:[%s0 + $0x100] sm:$0xff]
    %v30 = vld [vmem:[%s0 + $0x110] sm:$0xff]
    %v31 = vld [vmem:[%s1] sm:$0xf]
    %v32 = vld [vmem:[%s0 + $0x1] sm:$0xff]
    %v33 = vld [vmem:[%s0 + $0x11] sm:$0xff]
    %v34 = vld [vmem:[%s0 + $0x21] sm:$0xff]
    %v35 = vld [vmem:[%s0 + $0x31] sm:$0xff]
    %v36 = vld [vmem:[%s0 + $0x41] sm:$0xff]
    %v37 = vld [vmem:[%s0 + $0x51] sm:$0xff]
    %v38 = vld [vmem:[%s0 + $0x61] sm:$0xff]
    %v39 = vld [vmem:[%s0 + $0x71] sm:$0xff]
    %v40 = vld [vmem:[%s0 + $0xa1] sm:$0xff]
    %v41 = vld [vmem:[%s0 + $0xb1] sm:$0xff]
    %v42 = vld [vmem:[%s0 + $0xc1] sm:$0xff]
    %v43 = vld [vmem:[%s0 + $0xd1] sm:$0xff]
    %v44 = vld [vmem:[%s0 + $0xe1] sm:$0xff]
    %v45 = vld [vmem:[%s0 + $0xf1] sm:$0xff]
    %v46 = vld [vmem:[%s0 + $0x101] sm:$0xff]
    %v47 = vld [vmem:[%s0 + $0x111] sm:$0xff]
    %s48 = scalar_lea.vmem %s1, 4
    %v49 = vld [vmem:[%s48] sm:$0xf]
    %vm50 = vcmask 31744
    %v52 = vsel %vm50, %v32, 0
    %v55 = vsel %vm50, %v33, 0
    %v58 = vsel %vm50, %v34, 0
    %v61 = vsel %vm50, %v35, 0
    %v64 = vsel %vm50, %v36, 0
    %v67 = vsel %vm50, %v37, 0
    %v70 = vsel %vm50, %v38, 0
    %v73 = vsel %vm50, %v39, 0
    %v76 = vsel %vm50, %v40, 0
    %v79 = vsel %vm50, %v41, 0
    %v82 = vsel %vm50, %v42, 0
    %v85 = vsel %vm50, %v43, 0
    %v88 = vsel %vm50, %v44, 0
    %v91 = vsel %vm50, %v45, 0
    %v94 = vsel %vm50, %v46, 0
    %v97 = vsel %vm50, %v47, 0
    %vm99 = vcmask 1043456
    %v101 = vsel %vm99, %v49, 0
    %103 = vmatprep.subr.mxu0 0.0
    %104 = vmatpush1.msra.mxu0 %v101
    %105 = vmatprep.subr.mxu0 0.0
    %106 = vmatpush1.msra.mxu0 0.0
    %107 = vmatprep.subr.mxu0 0.0
    %108 = vmatpush1.msra.mxu0 0.0
    %109 = vmatprep.subr.mxu0 0.0
    %110 = vmatpush1.msra.mxu0 0.0
    %111 = vmatprep.subr.mxu0 0.0
    %112 = vmatpush1.msra.mxu0 0.0
    %113 = vmatprep.subr.mxu0 0.0
    %114 = vmatpush1.msra.mxu0 0.0
    %115 = vmatprep.subr.mxu0 0.0
    %116 = vmatpush1.msra.mxu0 0.0
    %117 = vmatprep.subr.mxu0 0.0
    %118 = vmatpush1.msra.mxu0 0.0
    %119 = vmatprep.subr.mxu0 0.0
    %120 = vmatpush1.msra.mxu0 0.0
    %121 = vmatprep.subr.mxu0 0.0
    %122 = vmatpush1.msra.mxu0 0.0
    %123 = vmatprep.subr.mxu0 0.0
    %124 = vmatpush1.msra.mxu0 0.0
    %125 = vmatprep.subr.mxu0 0.0
    %126 = vmatpush1.msra.mxu0 0.0
    %127 = vmatprep.subr.mxu0 0.0
    %128 = vmatpush1.msra.mxu0 0.0
    %129 = vmatprep.subr.mxu0 0.0
    %130 = vmatpush1.msra.mxu0 0.0
    %131 = vmatprep.subr.mxu0 0.0
    %132 = vmatpush1.msra.mxu0 0.0
    %133 = vmatprep.subr.mxu0 0.0
    %134 = vmatpush1.msra.mxu0 0.0
    %135 = vmatprep.subr.mxu0 0.0
    %136 = vmatpush1.msra.mxu0 0.0
    %137 = vmatprep.subr.mxu0 0.0
    %138 = vmatpush1.msra.mxu0 0.0
    %139 = vmatprep.subr.mxu0 0.0
    %140 = vmatpush1.msra.mxu0 0.0
    %141 = vmatprep.subr.mxu0 0.0
    %142 = vmatpush1.msra.mxu0 0.0
    %143 = vmatprep.subr.mxu0 0.0
    %144 = vmatpush1.msra.mxu0 0.0
    %145 = vmatprep.subr.mxu0 0.0
    %146 = vmatpush1.msra.mxu0 0.0
    %147 = vmatprep.subr.mxu0 0.0
    %148 = vmatpush1.msra.mxu0 0.0
    %149 = vmatprep.subr.mxu0 0.0
    %150 = vmatpush1.msra.mxu0 0.0
    %151 = vmatprep.subr.mxu0 0.0
    %152 = vmatpush1.msra.mxu0 0.0
    %153 = vmatprep.subr.mxu0 0.0
    %154 = vmatpush1.msra.mxu0 0.0
    %155 = vmatprep.subr.mxu0 0.0
    %156 = vmatpush1.msra.mxu0 0.0
    %157 = vmatprep.subr.mxu0 0.0
    %158 = vmatpush1.msra.mxu0 0.0
    %159 = vmatprep.subr.mxu0 0.0
    %160 = vmatpush1.msra.mxu0 0.0
    %161 = vmatprep.subr.mxu0 0.0
    %162 = vmatpush1.msra.mxu0 0.0
    %163 = vmatprep.subr.mxu0 0.0
    %164 = vmatpush1.msra.mxu0 0.0
    %165 = vmatprep.subr.mxu0 0.0
    %166 = vmatpush1.msra.mxu0 0.0
    %167 = vmatprep.mubr.f32.mxu0 0.0
    %168 = vmatmul.mubr.f32.gmra.mrb[0].mxu0 %v52
    %v169 = vpop.f32.mrb[0].mxu0
    %v170 = vadd.f32 0.0, %v169
    %v171 = vpop.f32.mrb[0].mxu0
    %172 = vmatprep.mubr.f32.mxu0 0.0
    %173 = vmatmul.mubr.f32.gmra.mrb[0].mxu0 %v55
    %v174 = vpop.f32.mrb[0].mxu0
    %v175 = vadd.f32 0.0, %v174
    %v176 = vpop.f32.mrb[0].mxu0
    %177 = vmatprep.mubr.f32.mxu0 0.0
    %178 = vmatmul.mubr.f32.gmra.mrb[0].mxu0 %v58
    %v179 = vpop.f32.mrb[0].mxu0
    %v180 = vadd.f32 0.0, %v179
    %v181 = vpop.f32.mrb[0].mxu0
    %182 = vmatprep.mubr.f32.mxu0 0.0
    %183 = vmatmul.mubr.f32.gmra.mrb[0].mxu0 %v61
    %v184 = vpop.f32.mrb[0].mxu0
    %v185 = vadd.f32 0.0, %v184
    %v186 = vpop.f32.mrb[0].mxu0
    %187 = vmatprep.mubr.f32.mxu0 0.0
    %188 = vmatmul.mubr.f32.gmra.mrb[0].mxu0 %v64
    %v189 = vpop.f32.mrb[0].mxu0
    %v190 = vadd.f32 0.0, %v189
    %v191 = vpop.f32.mrb[0].mxu0
    %192 = vmatprep.mubr.f32.mxu0 0.0
    %193 = vmatmul.mubr.f32.gmra.mrb[0].mxu0 %v67
    %v194 = vpop.f32.mrb[0].mxu0
    %v195 = vadd.f32 0.0, %v194
    %v196 = vpop.f32.mrb[0].mxu0
    %197 = vmatprep.mubr.f32.mxu0 0.0
    %198 = vmatmul.mubr.f32.gmra.mrb[0].mxu0 %v70
    %v199 = vpop.f32.mrb[0].mxu0
    %v200 = vadd.f32 0.0, %v199
    %v201 = vpop.f32.mrb[0].mxu0
    %202 = vmatprep.mubr.f32.mxu0 0.0
    %203 = vmatmul.mubr.f32.gmra.mrb[0].mxu0 %v73
    %v204 = vpop.f32.mrb[0].mxu0
    %v205 = vadd.f32 0.0, %v204
    %v206 = vpop.f32.mrb[0].mxu0
    %207 = vmatprep.mubr.f32.mxu0 0.0
    %208 = vmatmul.mubr.f32.gmra.mrb[0].mxu0 %v76
    %v209 = vpop.f32.mrb[0].mxu0
    %v210 = vadd.f32 0.0, %v209
    %v211 = vpop.f32.mrb[0].mxu0
    %212 = vmatprep.mubr.f32.mxu0 0.0
    %213 = vmatmul.mubr.f32.gmra.mrb[0].mxu0 %v79
    %v214 = vpop.f32.mrb[0].mxu0
    %v215 = vadd.f32 0.0, %v214
    %v216 = vpop.f32.mrb[0].mxu0
    %217 = vmatprep.mubr.f32.mxu0 0.0
    %218 = vmatmul.mubr.f32.gmra.mrb[0].mxu0 %v82
    %v219 = vpop.f32.mrb[0].mxu0
    %v220 = vadd.f32 0.0, %v219
    %v221 = vpop.f32.mrb[0].mxu0
    %222 = vmatprep.mubr.f32.mxu0 0.0
    %223 = vmatmul.mubr.f32.gmra.mrb[0].mxu0 %v85
    %v224 = vpop.f32.mrb[0].mxu0
    %v225 = vadd.f32 0.0, %v224
    %v226 = vpop.f32.mrb[0].mxu0
    %227 = vmatprep.mubr.f32.mxu0 0.0
    %228 = vmatmul.mubr.f32.gmra.mrb[0].mxu0 %v88
    %v229 = vpop.f32.mrb[0].mxu0
    %v230 = vadd.f32 0.0, %v229
    %v231 = vpop.f32.mrb[0].mxu0
    %232 = vmatprep.mubr.f32.mxu0 0.0
    %233 = vmatmul.mubr.f32.gmra.mrb[0].mxu0 %v91
    %v234 = vpop.f32.mrb[0].mxu0
    %v235 = vadd.f32 0.0, %v234
    %v236 = vpop.f32.mrb[0].mxu0
    %237 = vmatprep.mubr.f32.mxu0 0.0
    %238 = vmatmul.mubr.f32.gmra.mrb[0].mxu0 %v94
    %v239 = vpop.f32.mrb[0].mxu0
    %v240 = vadd.f32 0.0, %v239
    %v241 = vpop.f32.mrb[0].mxu0
    %242 = vmatprep.mubr.f32.mxu0 0.0
    %243 = vmatmul.mubr.f32.gmra.mrb[0].mxu0 %v97
    %v244 = vpop.f32.mrb[0].mxu0
    %v245 = vadd.f32 0.0, %v244
    %v246 = vpop.f32.mrb[0].mxu0
    %247 = vdwg.mxu0
    %v249 = vsel %vm50, %v15, 0
    %v252 = vsel %vm50, %v16, 0
    %v255 = vsel %vm50, %v17, 0
    %v258 = vsel %vm50, %v18, 0
    %v261 = vsel %vm50, %v19, 0
    %v264 = vsel %vm50, %v20, 0
    %v267 = vsel %vm50, %v21, 0
    %v270 = vsel %vm50, %v22, 0
    %v273 = vsel %vm50, %v23, 0
    %v276 = vsel %vm50, %v24, 0
    %v279 = vsel %vm50, %v25, 0
    %v282 = vsel %vm50, %v26, 0
    %v285 = vsel %vm50, %v27, 0
    %v288 = vsel %vm50, %v28, 0
    %v291 = vsel %vm50, %v29, 0
    %v294 = vsel %vm50, %v30, 0
    %v297 = vsel %vm99, %v31, 0
    %299 = vmatprep.subr.mxu0 0.0
    %300 = vmatpush1.msra.mxu0 %v297
    %301 = vmatprep.subr.mxu0 0.0
    %302 = vmatpush1.msra.mxu0 0.0
    %303 = vmatprep.subr.mxu0 0.0
    %304 = vmatpush1.msra.mxu0 0.0
    %305 = vmatprep.subr.mxu0 0.0
    %306 = vmatpush1.msra.mxu0 0.0
    %307 = vmatprep.subr.mxu0 0.0
    %308 = vmatpush1.msra.mxu0 0.0
    %309 = vmatprep.subr.mxu0 0.0
    %310 = vmatpush1.msra.mxu0 0.0
    %311 = vmatprep.subr.mxu0 0.0
    %312 = vmatpush1.msra.mxu0 0.0
    %313 = vmatprep.subr.mxu0 0.0
    %314 = vmatpush1.msra.mxu0 0.0
    %315 = vmatprep.subr.mxu0 0.0
    %316 = vmatpush1.msra.mxu0 0.0
    %317 = vmatprep.subr.mxu0 0.0
    %318 = vmatpush1.msra.mxu0 0.0
    %319 = vmatprep.subr.mxu0 0.0
    %320 = vmatpush1.msra.mxu0 0.0
    %321 = vmatprep.subr.mxu0 0.0
    %322 = vmatpush1.msra.mxu0 0.0
    %323 = vmatprep.subr.mxu0 0.0
    %324 = vmatpush1.msra.mxu0 0.0
    %325 = vmatprep.subr.mxu0 0.0
    %326 = vmatpush1.msra.mxu0 0.0
    %327 = vmatprep.subr.mxu0 0.0
    %328 = vmatpush1.msra.mxu0 0.0
    %329 = vmatprep.subr.mxu0 0.0
    %330 = vmatpush1.msra.mxu0 0.0
    %331 = vmatprep.subr.mxu0 0.0
    %332 = vmatpush1.msra.mxu0 0.0
    %333 = vmatprep.subr.mxu0 0.0
    %334 = vmatpush1.msra.mxu0 0.0
    %335 = vmatprep.subr.mxu0 0.0
    %336 = vmatpush1.msra.mxu0 0.0
    %337 = vmatprep.subr.mxu0 0.0
    %338 = vmatpush1.msra.mxu0 0.0
    %339 = vmatprep.subr.mxu0 0.0
    %340 = vmatpush1.msra.mxu0 0.0
    %341 = vmatprep.subr.mxu0 0.0
    %342 = vmatpush1.msra.mxu0 0.0
    %343 = vmatprep.subr.mxu0 0.0
    %344 = vmatpush1.msra.mxu0 0.0
    %345 = vmatprep.subr.mxu0 0.0
    %346 = vmatpush1.msra.mxu0 0.0
    %347 = vmatprep.subr.mxu0 0.0
    %348 = vmatpush1.msra.mxu0 0.0
    %349 = vmatprep.subr.mxu0 0.0
    %350 = vmatpush1.msra.mxu0 0.0
    %351 = vmatprep.subr.mxu0 0.0
    %352 = vmatpush1.msra.mxu0 0.0
    %353 = vmatprep.subr.mxu0 0.0
    %354 = vmatpush1.msra.mxu0 0.0
    %355 = vmatprep.subr.mxu0 0.0
    %356 = vmatpush1.msra.mxu0 0.0
    %357 = vmatprep.subr.mxu0 0.0
    %358 = vmatpush1.msra.mxu0 0.0
    %359 = vmatprep.subr.mxu0 0.0
    %360 = vmatpush1.msra.mxu0 0.0
    %361 = vmatprep.subr.mxu0 0.0
    %362 = vmatpush1.msra.mxu0 0.0
    %363 = vmatprep.mubr.f32.mxu0 0.0
    %364 = vmatmul.mubr.f32.gmra.mrb[0].mxu0 %v249
    %v365 = vpop.f32.mrb[0].mxu0
    %v366 = vadd.f32 %v170, %v365
    %v367 = vpop.f32.mrb[0].mxu0
    %368 = vmatprep.mubr.f32.mxu0 0.0
    %369 = vmatmul.mubr.f32.gmra.mrb[0].mxu0 %v252
    %v370 = vpop.f32.mrb[0].mxu0
    %v371 = vadd.f32 %v175, %v370
    %v372 = vpop.f32.mrb[0].mxu0
    %373 = vmatprep.mubr.f32.mxu0 0.0
    %374 = vmatmul.mubr.f32.gmra.mrb[0].mxu0 %v255
    %v375 = vpop.f32.mrb[0].mxu0
    %v376 = vadd.f32 %v180, %v375
    %v377 = vpop.f32.mrb[0].mxu0
    %378 = vmatprep.mubr.f32.mxu0 0.0
    %379 = vmatmul.mubr.f32.gmra.mrb[0].mxu0 %v258
    %v380 = vpop.f32.mrb[0].mxu0
    %v381 = vadd.f32 %v185, %v380
    %v382 = vpop.f32.mrb[0].mxu0
    %383 = vmatprep.mubr.f32.mxu0 0.0
    %384 = vmatmul.mubr.f32.gmra.mrb[0].mxu0 %v261
    %v385 = vpop.f32.mrb[0].mxu0
    %v386 = vadd.f32 %v190, %v385
    %v387 = vpop.f32.mrb[0].mxu0
    %388 = vmatprep.mubr.f32.mxu0 0.0
    %389 = vmatmul.mubr.f32.gmra.mrb[0].mxu0 %v264
    %v390 = vpop.f32.mrb[0].mxu0
    %v391 = vadd.f32 %v195, %v390
    %v392 = vpop.f32.mrb[0].mxu0
    %393 = vmatprep.mubr.f32.mxu0 0.0
    %394 = vmatmul.mubr.f32.gmra.mrb[0].mxu0 %v267
    %v395 = vpop.f32.mrb[0].mxu0
    %v396 = vadd.f32 %v200, %v395
    %v397 = vpop.f32.mrb[0].mxu0
    %398 = vmatprep.mubr.f32.mxu0 0.0
    %399 = vmatmul.mubr.f32.gmra.mrb[0].mxu0 %v270
    %v400 = vpop.f32.mrb[0].mxu0
    %v401 = vadd.f32 %v205, %v400
    %v402 = vpop.f32.mrb[0].mxu0
    %403 = vmatprep.mubr.f32.mxu0 0.0
    %404 = vmatmul.mubr.f32.gmra.mrb[0].mxu0 %v273
    %v405 = vpop.f32.mrb[0].mxu0
    %v406 = vadd.f32 %v210, %v405
    %v407 = vpop.f32.mrb[0].mxu0
    %408 = vmatprep.mubr.f32.mxu0 0.0
    %409 = vmatmul.mubr.f32.gmra.mrb[0].mxu0 %v276
    %v410 = vpop.f32.mrb[0].mxu0
    %v411 = vadd.f32 %v215, %v410
    %v412 = vpop.f32.mrb[0].mxu0
    %413 = vmatprep.mubr.f32.mxu0 0.0
    %414 = vmatmul.mubr.f32.gmra.mrb[0].mxu0 %v279
    %v415 = vpop.f32.mrb[0].mxu0
    %v416 = vadd.f32 %v220, %v415
    %v417 = vpop.f32.mrb[0].mxu0
    %418 = vmatprep.mubr.f32.mxu0 0.0
    %419 = vmatmul.mubr.f32.gmra.mrb[0].mxu0 %v282
    %v420 = vpop.f32.mrb[0].mxu0
    %v421 = vadd.f32 %v225, %v420
    %v422 = vpop.f32.mrb[0].mxu0
    %423 = vmatprep.mubr.f32.mxu0 0.0
    %424 = vmatmul.mubr.f32.gmra.mrb[0].mxu0 %v285
    %v425 = vpop.f32.mrb[0].mxu0
    %v426 = vadd.f32 %v230, %v425
    %v427 = vpop.f32.mrb[0].mxu0
    %428 = vmatprep.mubr.f32.mxu0 0.0
    %429 = vmatmul.mubr.f32.gmra.mrb[0].mxu0 %v288
    %v430 = vpop.f32.mrb[0].mxu0
    %v431 = vadd.f32 %v235, %v430
    %v432 = vpop.f32.mrb[0].mxu0
    %433 = vmatprep.mubr.f32.mxu0 0.0
    %434 = vmatmul.mubr.f32.gmra.mrb[0].mxu0 %v291
    %v435 = vpop.f32.mrb[0].mxu0
    %v436 = vadd.f32 %v240, %v435
    %v437 = vpop.f32.mrb[0].mxu0
    %438 = vmatprep.mubr.f32.mxu0 0.0
    %439 = vmatmul.mubr.f32.gmra.mrb[0].mxu0 %v294
    %v440 = vpop.f32.mrb[0].mxu0
    %v441 = vadd.f32 %v245, %v440
    %v442 = vpop.f32.mrb[0].mxu0
    %443 = vdwg.mxu0
    %v444 = vld [vmem:[%s0 + $0x2] sm:$0xff]
    %v445 = vld [vmem:[%s0 + $0x12] sm:$0xff]
    %v446 = vld [vmem:[%s0 + $0x22] sm:$0xff]
    %v447 = vld [vmem:[%s0 + $0x32] sm:$0xff]
    %v448 = vld [vmem:[%s0 + $0x42] sm:$0xff]
    %v449 = vld [vmem:[%s0 + $0x52] sm:$0xff]
    %v450 = vld [vmem:[%s0 + $0x62] sm:$0xff]
    %v451 = vld [vmem:[%s0 + $0x72] sm:$0xff]
    %v452 = vld [vmem:[%s0 + $0xa2] sm:$0xff]
    %v453 = vld [vmem:[%s0 + $0xb2] sm:$0xff]
    %v454 = vld [vmem:[%s0 + $0xc2] sm:$0xff]
    %v455 = vld [vmem:[%s0 + $0xd2] sm:$0xff]
    %v456 = vld [vmem:[%s0 + $0xe2] sm:$0xff]
    %v457 = vld [vmem:[%s0 + $0xf2] sm:$0xff]
    %v458 = vld [vmem:[%s0 + $0x102] sm:$0xff]
    %v459 = vld [vmem:[%s0 + $0x112] sm:$0xff]
    %s460 = scalar_lea.vmem %s1, 8
    %v461 = vld [vmem:[%s460] sm:$0xf]
    %v463 = vsel %vm50, %v444, 0
    %v466 = vsel %vm50, %v445, 0
    %v469 = vsel %vm50, %v446, 0
    %v472 = vsel %vm50, %v447, 0
    %v475 = vsel %vm50, %v448, 0
    %v478 = vsel %vm50, %v449, 0
    %v481 = vsel %vm50, %v450, 0
    %v484 = vsel %vm50, %v451, 0
    %v487 = vsel %vm50, %v452, 0
    %v490 = vsel %vm50, %v453, 0
    %v493 = vsel %vm50, %v454, 0
    %v496 = vsel %vm50, %v455, 0
    %v499 = vsel %vm50, %v456, 0
    %v502 = vsel %vm50, %v457, 0
    %v505 = vsel %vm50, %v458, 0
    %v508 = vsel %vm50, %v459, 0
    %v511 = vsel %vm99, %v461, 0
    %513 = vmatprep.subr.mxu0 0.0
    %514 = vmatpush1.msra.mxu0 %v511
    %515 = vmatprep.subr.mxu0 0.0
    %516 = vmatpush1.msra.mxu0 0.0
    %517 = vmatprep.subr.mxu0 0.0
    %518 = vmatpush1.msra.mxu0 0.0
    %519 = vmatprep.subr.mxu0 0.0
    %520 = vmatpush1.msra.mxu0 0.0
    %521 = vmatprep.subr.mxu0 0.0
    %522 = vmatpush1.msra.mxu0 0.0
    %523 = vmatprep.subr.mxu0 0.0
    %524 = vmatpush1.msra.mxu0 0.0
    %525 = vmatprep.subr.mxu0 0.0
    %526 = vmatpush1.msra.mxu0 0.0
    %527 = vmatprep.subr.mxu0 0.0
    %528 = vmatpush1.msra.mxu0 0.0
    %529 = vmatprep.subr.mxu0 0.0
    %530 = vmatpush1.msra.mxu0 0.0
    %531 = vmatprep.subr.mxu0 0.0
    %532 = vmatpush1.msra.mxu0 0.0
    %533 = vmatprep.subr.mxu0 0.0
    %534 = vmatpush1.msra.mxu0 0.0
    %535 = vmatprep.subr.mxu0 0.0
    %536 = vmatpush1.msra.mxu0 0.0
    %537 = vmatprep.subr.mxu0 0.0
    %538 = vmatpush1.msra.mxu0 0.0
    %539 = vmatprep.subr.mxu0 0.0
    %540 = vmatpush1.msra.mxu0 0.0
    %541 = vmatprep.subr.mxu0 0.0
    %542 = vmatpush1.msra.mxu0 0.0
    %543 = vmatprep.subr.mxu0 0.0
    %544 = vmatpush1.msra.mxu0 0.0
    %545 = vmatprep.subr.mxu0 0.0
    %546 = vmatpush1.msra.mxu0 0.0
    %547 = vmatprep.subr.mxu0 0.0
    %548 = vmatpush1.msra.mxu0 0.0
    %549 = vmatprep.subr.mxu0 0.0
    %550 = vmatpush1.msra.mxu0 0.0
    %551 = vmatprep.subr.mxu0 0.0
    %552 = vmatpush1.msra.mxu0 0.0
    %553 = vmatprep.subr.mxu0 0.0
    %554 = vmatpush1.msra.mxu0 0.0
    %555 = vmatprep.subr.mxu0 0.0
    %556 = vmatpush1.msra.mxu0 0.0
    %557 = vmatprep.subr.mxu0 0.0
    %558 = vmatpush1.msra.mxu0 0.0
    %559 = vmatprep.subr.mxu0 0.0
    %560 = vmatpush1.msra.mxu0 0.0
    %561 = vmatprep.subr.mxu0 0.0
    %562 = vmatpush1.msra.mxu0 0.0
    %563 = vmatprep.subr.mxu0 0.0
    %564 = vmatpush1.msra.mxu0 0.0
    %565 = vmatprep.subr.mxu0 0.0
    %566 = vmatpush1.msra.mxu0 0.0
    %567 = vmatprep.subr.mxu0 0.0
    %568 = vmatpush1.msra.mxu0 0.0
    %569 = vmatprep.subr.mxu0 0.0
    %570 = vmatpush1.msra.mxu0 0.0
    %571 = vmatprep.subr.mxu0 0.0
    %572 = vmatpush1.msra.mxu0 0.0
    %573 = vmatprep.subr.mxu0 0.0
    %574 = vmatpush1.msra.mxu0 0.0
    %575 = vmatprep.subr.mxu0 0.0
    %576 = vmatpush1.msra.mxu0 0.0
    %577 = vmatprep.mubr.f32.mxu0 0.0
    %578 = vmatmul.mubr.f32.gmra.mrb[0].mxu0 %v463
    %v579 = vpop.f32.mrb[0].mxu0
    %v580 = vadd.f32 0.0, %v579
    %v581 = vpop.f32.mrb[0].mxu0
    %582 = vmatprep.mubr.f32.mxu0 0.0
    %583 = vmatmul.mubr.f32.gmra.mrb[0].mxu0 %v466
    %v584 = vpop.f32.mrb[0].mxu0
    %v585 = vadd.f32 0.0, %v584
    %v586 = vpop.f32.mrb[0].mxu0
    %587 = vmatprep.mubr.f32.mxu0 0.0
    %588 = vmatmul.mubr.f32.gmra.mrb[0].mxu0 %v469
    %v589 = vpop.f32.mrb[0].mxu0
    %v590 = vadd.f32 0.0, %v589
    %v591 = vpop.f32.mrb[0].mxu0
    %592 = vmatprep.mubr.f32.mxu0 0.0
    %593 = vmatmul.mubr.f32.gmra.mrb[0].mxu0 %v472
    %v594 = vpop.f32.mrb[0].mxu0
    %v595 = vadd.f32 0.0, %v594
    %v596 = vpop.f32.mrb[0].mxu0
    %597 = vmatprep.mubr.f32.mxu0 0.0
    %598 = vmatmul.mubr.f32.gmra.mrb[0].mxu0 %v475
    %v599 = vpop.f32.mrb[0].mxu0
    %v600 = vadd.f32 0.0, %v599
    %v601 = vpop.f32.mrb[0].mxu0
    %602 = vmatprep.mubr.f32.mxu0 0.0
    %603 = vmatmul.mubr.f32.gmra.mrb[0].mxu0 %v478
    %v604 = vpop.f32.mrb[0].mxu0
    %v605 = vadd.f32 0.0, %v604
    %v606 = vpop.f32.mrb[0].mxu0
    %607 = vmatprep.mubr.f32.mxu0 0.0
    %608 = vmatmul.mubr.f32.gmra.mrb[0].mxu0 %v481
    %v609 = vpop.f32.mrb[0].mxu0
    %v610 = vadd.f32 0.0, %v609
    %v611 = vpop.f32.mrb[0].mxu0
    %612 = vmatprep.mubr.f32.mxu0 0.0
    %613 = vmatmul.mubr.f32.gmra.mrb[0].mxu0 %v484
    %v614 = vpop.f32.mrb[0].mxu0
    %v615 = vadd.f32 0.0, %v614
    %v616 = vpop.f32.mrb[0].mxu0
    %617 = vmatprep.mubr.f32.mxu0 0.0
    %618 = vmatmul.mubr.f32.gmra.mrb[0].mxu0 %v487
    %v619 = vpop.f32.mrb[0].mxu0
    %v620 = vadd.f32 0.0, %v619
    %v621 = vpop.f32.mrb[0].mxu0
    %622 = vmatprep.mubr.f32.mxu0 0.0
    %623 = vmatmul.mubr.f32.gmra.mrb[0].mxu0 %v490
    %v624 = vpop.f32.mrb[0].mxu0
    %v625 = vadd.f32 0.0, %v624
    %v626 = vpop.f32.mrb[0].mxu0
    %627 = vmatprep.mubr.f32.mxu0 0.0
    %628 = vmatmul.mubr.f32.gmra.mrb[0].mxu0 %v493
    %v629 = vpop.f32.mrb[0].mxu0
    %v630 = vadd.f32 0.0, %v629
    %v631 = vpop.f32.mrb[0].mxu0
    %632 = vmatprep.mubr.f32.mxu0 0.0
    %633 = vmatmul.mubr.f32.gmra.mrb[0].mxu0 %v496
    %v634 = vpop.f32.mrb[0].mxu0
    %v635 = vadd.f32 0.0, %v634
    %v636 = vpop.f32.mrb[0].mxu0
    %637 = vmatprep.mubr.f32.mxu0 0.0
    %638 = vmatmul.mubr.f32.gmra.mrb[0].mxu0 %v499
    %v639 = vpop.f32.mrb[0].mxu0
    %v640 = vadd.f32 0.0, %v639
    %v641 = vpop.f32.mrb[0].mxu0
    %642 = vmatprep.mubr.f32.mxu0 0.0
    %643 = vmatmul.mubr.f32.gmra.mrb[0].mxu0 %v502
    %v644 = vpop.f32.mrb[0].mxu0
    %v645 = vadd.f32 0.0, %v644
    %v646 = vpop.f32.mrb[0].mxu0
    %647 = vmatprep.mubr.f32.mxu0 0.0
    %648 = vmatmul.mubr.f32.gmra.mrb[0].mxu0 %v505
    %v649 = vpop.f32.mrb[0].mxu0
    %v650 = vadd.f32 0.0, %v649
    %v651 = vpop.f32.mrb[0].mxu0
    %652 = vmatprep.mubr.f32.mxu0 0.0
    %653 = vmatmul.mubr.f32.gmra.mrb[0].mxu0 %v508
    %v654 = vpop.f32.mrb[0].mxu0
    %v655 = vadd.f32 0.0, %v654
    %v656 = vpop.f32.mrb[0].mxu0
    %657 = vdwg.mxu0
    %v658 = vadd.f32 %v366, %v580
    %v659 = vadd.f32 %v371, %v585
    %v660 = vadd.f32 %v376, %v590
    %v661 = vadd.f32 %v381, %v595
    %v662 = vadd.f32 %v386, %v600
    %v663 = vadd.f32 %v391, %v605
    %v664 = vadd.f32 %v396, %v610
    %v665 = vadd.f32 %v401, %v615
    %v666 = vadd.f32 %v406, %v620
    %v667 = vadd.f32 %v411, %v625
    %v668 = vadd.f32 %v416, %v630
    %v669 = vadd.f32 %v421, %v635
    %v670 = vadd.f32 %v426, %v640
    %v671 = vadd.f32 %v431, %v645
    %v672 = vadd.f32 %v436, %v650
    %v673 = vadd.f32 %v441, %v655
    %s674 = scalar_lea.vmem %s0, 16
    %v675 = vld [vmem:[%s674] sm:$0xff]
    %v676 = vld [vmem:[%s674 + $0x10] sm:$0xff]
    %v677 = vld [vmem:[%s674 + $0x20] sm:$0xff]
    %v678 = vld [vmem:[%s674 + $0x30] sm:$0xff]
    %v679 = vld [vmem:[%s674 + $0x40] sm:$0xff]
    %v680 = vld [vmem:[%s674 + $0x50] sm:$0xff]
    %v681 = vld [vmem:[%s674 + $0x60] sm:$0xff]
    %v682 = vld [vmem:[%s674 + $0x70] sm:$0xff]
    %v683 = vld [vmem:[%s674 + $0xa0] sm:$0xff]
    %v684 = vld [vmem:[%s674 + $0xb0] sm:$0xff]
    %v685 = vld [vmem:[%s674 + $0xc0] sm:$0xff]
    %v686 = vld [vmem:[%s674 + $0xd0] sm:$0xff]
    %v687 = vld [vmem:[%s674 + $0xe0] sm:$0xff]
    %v688 = vld [vmem:[%s674 + $0xf0] sm:$0xff]
    %v689 = vld [vmem:[%s674 + $0x100] sm:$0xff]
    %v690 = vld [vmem:[%s674 + $0x110] sm:$0xff]
    %s691 = scalar_lea.vmem %s1, 12
    %v692 = vld [vmem:[%s691] sm:$0xf]
    %v694 = vsel %vm50, %v675, 0
    %v697 = vsel %vm50, %v676, 0
    %v700 = vsel %vm50, %v677, 0
    %v703 = vsel %vm50, %v678, 0
    %v706 = vsel %vm50, %v679, 0
    %v709 = vsel %vm50, %v680, 0
    %v712 = vsel %vm50, %v681, 0
    %v715 = vsel %vm50, %v682, 0
    %v718 = vsel %vm50, %v683, 0
    %v721 = vsel %vm50, %v684, 0
    %v724 = vsel %vm50, %v685, 0
    %v727 = vsel %vm50, %v686, 0
    %v730 = vsel %vm50, %v687, 0
    %v733 = vsel %vm50, %v688, 0
    %v736 = vsel %vm50, %v689, 0
    %v739 = vsel %vm50, %v690, 0
    %v742 = vsel %vm99, %v692, 0
    %744 = vmatprep.subr.mxu0 0.0
    %745 = vmatpush1.msra.mxu0 %v742
    %746 = vmatprep.subr.mxu0 0.0
    %747 = vmatpush1.msra.mxu0 0.0
    %748 = vmatprep.subr.mxu0 0.0
    %749 = vmatpush1.msra.mxu0 0.0
    %750 = vmatprep.subr.mxu0 0.0
    %751 = vmatpush1.msra.mxu0 0.0
    %752 = vmatprep.subr.mxu0 0.0
    %753 = vmatpush1.msra.mxu0 0.0
    %754 = vmatprep.subr.mxu0 0.0
    %755 = vmatpush1.msra.mxu0 0.0
    %756 = vmatprep.subr.mxu0 0.0
    %757 = vmatpush1.msra.mxu0 0.0
    %758 = vmatprep.subr.mxu0 0.0
    %759 = vmatpush1.msra.mxu0 0.0
    %760 = vmatprep.subr.mxu0 0.0
    %761 = vmatpush1.msra.mxu0 0.0
    %762 = vmatprep.subr.mxu0 0.0
    %763 = vmatpush1.msra.mxu0 0.0
    %764 = vmatprep.subr.mxu0 0.0
    %765 = vmatpush1.msra.mxu0 0.0
    %766 = vmatprep.subr.mxu0 0.0
    %767 = vmatpush1.msra.mxu0 0.0
    %768 = vmatprep.subr.mxu0 0.0
    %769 = vmatpush1.msra.mxu0 0.0
    %770 = vmatprep.subr.mxu0 0.0
    %771 = vmatpush1.msra.mxu0 0.0
    %772 = vmatprep.subr.mxu0 0.0
    %773 = vmatpush1.msra.mxu0 0.0
    %774 = vmatprep.subr.mxu0 0.0
    %775 = vmatpush1.msra.mxu0 0.0
    %776 = vmatprep.subr.mxu0 0.0
    %777 = vmatpush1.msra.mxu0 0.0
    %778 = vmatprep.subr.mxu0 0.0
    %779 = vmatpush1.msra.mxu0 0.0
    %780 = vmatprep.subr.mxu0 0.0
    %781 = vmatpush1.msra.mxu0 0.0
    %782 = vmatprep.subr.mxu0 0.0
    %783 = vmatpush1.msra.mxu0 0.0
    %784 = vmatprep.subr.mxu0 0.0
    %785 = vmatpush1.msra.mxu0 0.0
    %786 = vmatprep.subr.mxu0 0.0
    %787 = vmatpush1.msra.mxu0 0.0
    %788 = vmatprep.subr.mxu0 0.0
    %789 = vmatpush1.msra.mxu0 0.0
    %790 = vmatprep.subr.mxu0 0.0
    %791 = vmatpush1.msra.mxu0 0.0
    %792 = vmatprep.subr.mxu0 0.0
    %793 = vmatpush1.msra.mxu0 0.0
    %794 = vmatprep.subr.mxu0 0.0
    %795 = vmatpush1.msra.mxu0 0.0
    %796 = vmatprep.subr.mxu0 0.0
    %797 = vmatpush1.msra.mxu0 0.0
    %798 = vmatprep.subr.mxu0 0.0
    %799 = vmatpush1.msra.mxu0 0.0
    %800 = vmatprep.subr.mxu0 0.0
    %801 = vmatpush1.msra.mxu0 0.0
    %802 = vmatprep.subr.mxu0 0.0
    %803 = vmatpush1.msra.mxu0 0.0
    %804 = vmatprep.subr.mxu0 0.0
    %805 = vmatpush1.msra.mxu0 0.0
    %806 = vmatprep.subr.mxu0 0.0
    %807 = vmatpush1.msra.mxu0 0.0
    %808 = vmatprep.mubr.f32.mxu0 0.0
    %809 = vmatmul.mubr.f32.gmra.mrb[0].mxu0 %v694
    %v810 = vpop.f32.mrb[0].mxu0
    %v811 = vadd.f32 0.0, %v810
    %v812 = vpop.f32.mrb[0].mxu0
    %813 = vmatprep.mubr.f32.mxu0 0.0
    %814 = vmatmul.mubr.f32.gmra.mrb[0].mxu0 %v697
    %v815 = vpop.f32.mrb[0].mxu0
    %v816 = vadd.f32 0.0, %v815
    %v817 = vpop.f32.mrb[0].mxu0
    %818 = vmatprep.mubr.f32.mxu0 0.0
    %819 = vmatmul.mubr.f32.gmra.mrb[0].mxu0 %v700
    %v820 = vpop.f32.mrb[0].mxu0
    %v821 = vadd.f32 0.0, %v820
    %v822 = vpop.f32.mrb[0].mxu0
    %823 = vmatprep.mubr.f32.mxu0 0.0
    %824 = vmatmul.mubr.f32.gmra.mrb[0].mxu0 %v703
    %v825 = vpop.f32.mrb[0].mxu0
    %v826 = vadd.f32 0.0, %v825
    %v827 = vpop.f32.mrb[0].mxu0
    %828 = vmatprep.mubr.f32.mxu0 0.0
    %829 = vmatmul.mubr.f32.gmra.mrb[0].mxu0 %v706
    %v830 = vpop.f32.mrb[0].mxu0
    %v831 = vadd.f32 0.0, %v830
    %v832 = vpop.f32.mrb[0].mxu0
    %833 = vmatprep.mubr.f32.mxu0 0.0
    %834 = vmatmul.mubr.f32.gmra.mrb[0].mxu0 %v709
    %v835 = vpop.f32.mrb[0].mxu0
    %v836 = vadd.f32 0.0, %v835
    %v837 = vpop.f32.mrb[0].mxu0
    %838 = vmatprep.mubr.f32.mxu0 0.0
    %839 = vmatmul.mubr.f32.gmra.mrb[0].mxu0 %v712
    %v840 = vpop.f32.mrb[0].mxu0
    %v841 = vadd.f32 0.0, %v840
    %v842 = vpop.f32.mrb[0].mxu0
    %843 = vmatprep.mubr.f32.mxu0 0.0
    %844 = vmatmul.mubr.f32.gmra.mrb[0].mxu0 %v715
    %v845 = vpop.f32.mrb[0].mxu0
    %v846 = vadd.f32 0.0, %v845
    %v847 = vpop.f32.mrb[0].mxu0
    %848 = vmatprep.mubr.f32.mxu0 0.0
    %849 = vmatmul.mubr.f32.gmra.mrb[0].mxu0 %v718
    %v850 = vpop.f32.mrb[0].mxu0
    %v851 = vadd.f32 0.0, %v850
    %v852 = vpop.f32.mrb[0].mxu0
    %853 = vmatprep.mubr.f32.mxu0 0.0
    %854 = vmatmul.mubr.f32.gmra.mrb[0].mxu0 %v721
    %v855 = vpop.f32.mrb[0].mxu0
    %v856 = vadd.f32 0.0, %v855
    %v857 = vpop.f32.mrb[0].mxu0
    %858 = vmatprep.mubr.f32.mxu0 0.0
    %859 = vmatmul.mubr.f32.gmra.mrb[0].mxu0 %v724
    %v860 = vpop.f32.mrb[0].mxu0
    %v861 = vadd.f32 0.0, %v860
    %v862 = vpop.f32.mrb[0].mxu0
    %863 = vmatprep.mubr.f32.mxu0 0.0
    %864 = vmatmul.mubr.f32.gmra.mrb[0].mxu0 %v727
    %v865 = vpop.f32.mrb[0].mxu0
    %v866 = vadd.f32 0.0, %v865
    %v867 = vpop.f32.mrb[0].mxu0
    %868 = vmatprep.mubr.f32.mxu0 0.0
    %869 = vmatmul.mubr.f32.gmra.mrb[0].mxu0 %v730
    %v870 = vpop.f32.mrb[0].mxu0
    %v871 = vadd.f32 0.0, %v870
    %v872 = vpop.f32.mrb[0].mxu0
    %873 = vmatprep.mubr.f32.mxu0 0.0
    %874 = vmatmul.mubr.f32.gmra.mrb[0].mxu0 %v733
    %v875 = vpop.f32.mrb[0].mxu0
    %v876 = vadd.f32 0.0, %v875
    %v877 = vpop.f32.mrb[0].mxu0
    %878 = vmatprep.mubr.f32.mxu0 0.0
    %879 = vmatmul.mubr.f32.gmra.mrb[0].mxu0 %v736
    %v880 = vpop.f32.mrb[0].mxu0
    %v881 = vadd.f32 0.0, %v880
    %v882 = vpop.f32.mrb[0].mxu0
    %883 = vmatprep.mubr.f32.mxu0 0.0
    %884 = vmatmul.mubr.f32.gmra.mrb[0].mxu0 %v739
    %v885 = vpop.f32.mrb[0].mxu0
    %v886 = vadd.f32 0.0, %v885
    %v887 = vpop.f32.mrb[0].mxu0
    %888 = vdwg.mxu0
    %v889 = vadd.f32 %v658, %v811
    %v890 = vadd.f32 %v659, %v816
    %v891 = vadd.f32 %v660, %v821
    %v892 = vadd.f32 %v661, %v826
    %v893 = vadd.f32 %v662, %v831
    %v894 = vadd.f32 %v663, %v836
    %v895 = vadd.f32 %v664, %v841
    %v896 = vadd.f32 %v665, %v846
    %v897 = vadd.f32 %v666, %v851
    %v898 = vadd.f32 %v667, %v856
    %v899 = vadd.f32 %v668, %v861
    %v900 = vadd.f32 %v669, %v866
    %v901 = vadd.f32 %v670, %v871
    %v902 = vadd.f32 %v671, %v876
    %v903 = vadd.f32 %v672, %v881
    %v904 = vadd.f32 %v673, %v886
    %v905 = vld [vmem:[%s674 + $0x1] sm:$0xff]
    %v906 = vld [vmem:[%s674 + $0x11] sm:$0xff]
    %v907 = vld [vmem:[%s674 + $0x21] sm:$0xff]
    %v908 = vld [vmem:[%s674 + $0x31] sm:$0xff]
    %v909 = vld [vmem:[%s674 + $0x41] sm:$0xff]
    %v910 = vld [vmem:[%s674 + $0x51] sm:$0xff]
    %v911 = vld [vmem:[%s674 + $0x61] sm:$0xff]
    %v912 = vld [vmem:[%s674 + $0x71] sm:$0xff]
    %v913 = vld [vmem:[%s674 + $0xa1] sm:$0xff]
    %v914 = vld [vmem:[%s674 + $0xb1] sm:$0xff]
    %v915 = vld [vmem:[%s674 + $0xc1] sm:$0xff]
    %v916 = vld [vmem:[%s674 + $0xd1] sm:$0xff]
    %v917 = vld [vmem:[%s674 + $0xe1] sm:$0xff]
    %v918 = vld [vmem:[%s674 + $0xf1] sm:$0xff]
    %v919 = vld [vmem:[%s674 + $0x101] sm:$0xff]
    %v920 = vld [vmem:[%s674 + $0x111] sm:$0xff]
    %s921 = scalar_lea.vmem %s1, 16
    %v922 = vld [vmem:[%s921] sm:$0xf]
    %v924 = vsel %vm50, %v905, 0
    %v927 = vsel %vm50, %v906, 0
    %v930 = vsel %vm50, %v907, 0
    %v933 = vsel %vm50, %v908, 0
    %v936 = vsel %vm50, %v909, 0
    %v939 = vsel %vm50, %v910, 0
    %v942 = vsel %vm50, %v911, 0
    %v945 = vsel %vm50, %v912, 0
    %v948 = vsel %vm50, %v913, 0
    %v951 = vsel %vm50, %v914, 0
    %v954 = vsel %vm50, %v915, 0
    %v957 = vsel %vm50, %v916, 0
    %v960 = vsel %vm50, %v917, 0
    %v963 = vsel %vm50, %v918, 0
    %v966 = vsel %vm50, %v919, 0
    %v969 = vsel %vm50, %v920, 0
    %v972 = vsel %vm99, %v922, 0
    %974 = vmatprep.subr.mxu0 0.0
    %975 = vmatpush1.msra.mxu0 %v972
    %976 = vmatprep.subr.mxu0 0.0
    %977 = vmatpush1.msra.mxu0 0.0
    %978 = vmatprep.subr.mxu0 0.0
    %979 = vmatpush1.msra.mxu0 0.0
    %980 = vmatprep.subr.mxu0 0.0
    %981 = vmatpush1.msra.mxu0 0.0
    %982 = vmatprep.subr.mxu0 0.0
    %983 = vmatpush1.msra.mxu0 0.0
    %984 = vmatprep.subr.mxu0 0.0
    %985 = vmatpush1.msra.mxu0 0.0
    %986 = vmatprep.subr.mxu0 0.0
    %987 = vmatpush1.msra.mxu0 0.0
    %988 = vmatprep.subr.mxu0 0.0
    %989 = vmatpush1.msra.mxu0 0.0
    %990 = vmatprep.subr.mxu0 0.0
    %991 = vmatpush1.msra.mxu0 0.0
    %992 = vmatprep.subr.mxu0 0.0
    %993 = vmatpush1.msra.mxu0 0.0
    %994 = vmatprep.subr.mxu0 0.0
    %995 = vmatpush1.msra.mxu0 0.0
    %996 = vmatprep.subr.mxu0 0.0
    %997 = vmatpush1.msra.mxu0 0.0
    %998 = vmatprep.subr.mxu0 0.0
    %999 = vmatpush1.msra.mxu0 0.0
    %1000 = vmatprep.subr.mxu0 0.0
    %1001 = vmatpush1.msra.mxu0 0.0
    %1002 = vmatprep.subr.mxu0 0.0
    %1003 = vmatpush1.msra.mxu0 0.0
    %1004 = vmatprep.subr.mxu0 0.0
    %1005 = vmatpush1.msra.mxu0 0.0
    %1006 = vmatprep.subr.mxu0 0.0
    %1007 = vmatpush1.msra.mxu0 0.0
    %1008 = vmatprep.subr.mxu0 0.0
    %1009 = vmatpush1.msra.mxu0 0.0
    %1010 = vmatprep.subr.mxu0 0.0
    %1011 = vmatpush1.msra.mxu0 0.0
    %1012 = vmatprep.subr.mxu0 0.0
    %1013 = vmatpush1.msra.mxu0 0.0
    %1014 = vmatprep.subr.mxu0 0.0
    %1015 = vmatpush1.msra.mxu0 0.0
    %1016 = vmatprep.subr.mxu0 0.0
    %1017 = vmatpush1.msra.mxu0 0.0
    %1018 = vmatprep.subr.mxu0 0.0
    %1019 = vmatpush1.msra.mxu0 0.0
    %1020 = vmatprep.subr.mxu0 0.0
    %1021 = vmatpush1.msra.mxu0 0.0
    %1022 = vmatprep.subr.mxu0 0.0
    %1023 = vmatpush1.msra.mxu0 0.0
    %1024 = vmatprep.subr.mxu0 0.0
    %1025 = vmatpush1.msra.mxu0 0.0
    %1026 = vmatprep.subr.mxu0 0.0
    %1027 = vmatpush1.msra.mxu0 0.0
    %1028 = vmatprep.subr.mxu0 0.0
    %1029 = vmatpush1.msra.mxu0 0.0
    %1030 = vmatprep.subr.mxu0 0.0
    %1031 = vmatpush1.msra.mxu0 0.0
    %1032 = vmatprep.subr.mxu0 0.0
    %1033 = vmatpush1.msra.mxu0 0.0
    %1034 = vmatprep.subr.mxu0 0.0
    %1035 = vmatpush1.msra.mxu0 0.0
    %1036 = vmatprep.subr.mxu0 0.0
    %1037 = vmatpush1.msra.mxu0 0.0
    %1038 = vmatprep.mubr.f32.mxu0 0.0
    %1039 = vmatmul.mubr.f32.gmra.mrb[0].mxu0 %v924
    %v1040 = vpop.f32.mrb[0].mxu0
    %v1041 = vadd.f32 0.0, %v1040
    %v1042 = vpop.f32.mrb[0].mxu0
    %1043 = vmatprep.mubr.f32.mxu0 0.0
    %1044 = vmatmul.mubr.f32.gmra.mrb[0].mxu0 %v927
    %v1045 = vpop.f32.mrb[0].mxu0
    %v1046 = vadd.f32 0.0, %v1045
    %v1047 = vpop.f32.mrb[0].mxu0
    %1048 = vmatprep.mubr.f32.mxu0 0.0
    %1049 = vmatmul.mubr.f32.gmra.mrb[0].mxu0 %v930
    %v1050 = vpop.f32.mrb[0].mxu0
    %v1051 = vadd.f32 0.0, %v1050
    %v1052 = vpop.f32.mrb[0].mxu0
    %1053 = vmatprep.mubr.f32.mxu0 0.0
    %1054 = vmatmul.mubr.f32.gmra.mrb[0].mxu0 %v933
    %v1055 = vpop.f32.mrb[0].mxu0
    %v1056 = vadd.f32 0.0, %v1055
    %v1057 = vpop.f32.mrb[0].mxu0
    %1058 = vmatprep.mubr.f32.mxu0 0.0
    %1059 = vmatmul.mubr.f32.gmra.mrb[0].mxu0 %v936
    %v1060 = vpop.f32.mrb[0].mxu0
    %v1061 = vadd.f32 0.0, %v1060
    %v1062 = vpop.f32.mrb[0].mxu0
    %1063 = vmatprep.mubr.f32.mxu0 0.0
    %1064 = vmatmul.mubr.f32.gmra.mrb[0].mxu0 %v939
    %v1065 = vpop.f32.mrb[0].mxu0
    %v1066 = vadd.f32 0.0, %v1065
    %v1067 = vpop.f32.mrb[0].mxu0
    %1068 = vmatprep.mubr.f32.mxu0 0.0
    %1069 = vmatmul.mubr.f32.gmra.mrb[0].mxu0 %v942
    %v1070 = vpop.f32.mrb[0].mxu0
    %v1071 = vadd.f32 0.0, %v1070
    %v1072 = vpop.f32.mrb[0].mxu0
    %1073 = vmatprep.mubr.f32.mxu0 0.0
    %1074 = vmatmul.mubr.f32.gmra.mrb[0].mxu0 %v945
    %v1075 = vpop.f32.mrb[0].mxu0
    %v1076 = vadd.f32 0.0, %v1075
    %v1077 = vpop.f32.mrb[0].mxu0
    %1078 = vmatprep.mubr.f32.mxu0 0.0
    %1079 = vmatmul.mubr.f32.gmra.mrb[0].mxu0 %v948
    %v1080 = vpop.f32.mrb[0].mxu0
    %v1081 = vadd.f32 0.0, %v1080
    %v1082 = vpop.f32.mrb[0].mxu0
    %1083 = vmatprep.mubr.f32.mxu0 0.0
    %1084 = vmatmul.mubr.f32.gmra.mrb[0].mxu0 %v951
    %v1085 = vpop.f32.mrb[0].mxu0
    %v1086 = vadd.f32 0.0, %v1085
    %v1087 = vpop.f32.mrb[0].mxu0
    %1088 = vmatprep.mubr.f32.mxu0 0.0
    %1089 = vmatmul.mubr.f32.gmra.mrb[0].mxu0 %v954
    %v1090 = vpop.f32.mrb[0].mxu0
    %v1091 = vadd.f32 0.0, %v1090
    %v1092 = vpop.f32.mrb[0].mxu0
    %1093 = vmatprep.mubr.f32.mxu0 0.0
    %1094 = vmatmul.mubr.f32.gmra.mrb[0].mxu0 %v957
    %v1095 = vpop.f32.mrb[0].mxu0
    %v1096 = vadd.f32 0.0, %v1095
    %v1097 = vpop.f32.mrb[0].mxu0
    %1098 = vmatprep.mubr.f32.mxu0 0.0
    %1099 = vmatmul.mubr.f32.gmra.mrb[0].mxu0 %v960
    %v1100 = vpop.f32.mrb[0].mxu0
    %v1101 = vadd.f32 0.0, %v1100
    %v1102 = vpop.f32.mrb[0].mxu0
    %1103 = vmatprep.mubr.f32.mxu0 0.0
    %1104 = vmatmul.mubr.f32.gmra.mrb[0].mxu0 %v963
    %v1105 = vpop.f32.mrb[0].mxu0
    %v1106 = vadd.f32 0.0, %v1105
    %v1107 = vpop.f32.mrb[0].mxu0
    %1108 = vmatprep.mubr.f32.mxu0 0.0
    %1109 = vmatmul.mubr.f32.gmra.mrb[0].mxu0 %v966
    %v1110 = vpop.f32.mrb[0].mxu0
    %v1111 = vadd.f32 0.0, %v1110
    %v1112 = vpop.f32.mrb[0].mxu0
    %1113 = vmatprep.mubr.f32.mxu0 0.0
    %1114 = vmatmul.mubr.f32.gmra.mrb[0].mxu0 %v969
    %v1115 = vpop.f32.mrb[0].mxu0
    %v1116 = vadd.f32 0.0, %v1115
    %v1117 = vpop.f32.mrb[0].mxu0
    %1118 = vdwg.mxu0
    %v1119 = vadd.f32 %v889, %v1041
    %v1120 = vadd.f32 %v890, %v1046
    %v1121 = vadd.f32 %v891, %v1051
    %v1122 = vadd.f32 %v892, %v1056
    %v1123 = vadd.f32 %v893, %v1061
    %v1124 = vadd.f32 %v894, %v1066
    %v1125 = vadd.f32 %v895, %v1071
    %v1126 = vadd.f32 %v896, %v1076
    %v1127 = vadd.f32 %v897, %v1081
    %v1128 = vadd.f32 %v898, %v1086
    %v1129 = vadd.f32 %v899, %v1091
    %v1130 = vadd.f32 %v900, %v1096
    %v1131 = vadd.f32 %v901, %v1101
    %v1132 = vadd.f32 %v902, %v1106
    %v1133 = vadd.f32 %v903, %v1111
    %v1134 = vadd.f32 %v904, %v1116
    %v1135 = vld [vmem:[%s674 + $0x2] sm:$0xff]
    %v1136 = vld [vmem:[%s674 + $0x12] sm:$0xff]
    %v1137 = vld [vmem:[%s674 + $0x22] sm:$0xff]
    %v1138 = vld [vmem:[%s674 + $0x32] sm:$0xff]
    %v1139 = vld [vmem:[%s674 + $0x42] sm:$0xff]
    %v1140 = vld [vmem:[%s674 + $0x52] sm:$0xff]
    %v1141 = vld [vmem:[%s674 + $0x62] sm:$0xff]
    %v1142 = vld [vmem:[%s674 + $0x72] sm:$0xff]
    %v1143 = vld [vmem:[%s674 + $0xa2] sm:$0xff]
    %v1144 = vld [vmem:[%s674 + $0xb2] sm:$0xff]
    %v1145 = vld [vmem:[%s674 + $0xc2] sm:$0xff]
    %v1146 = vld [vmem:[%s674 + $0xd2] sm:$0xff]
    %v1147 = vld [vmem:[%s674 + $0xe2] sm:$0xff]
    %v1148 = vld [vmem:[%s674 + $0xf2] sm:$0xff]
    %v1149 = vld [vmem:[%s674 + $0x102] sm:$0xff]
    %v1150 = vld [vmem:[%s674 + $0x112] sm:$0xff]
    %s1151 = scalar_lea.vmem %s1, 20
    %v1152 = vld [vmem:[%s1151] sm:$0xf]
    %v1154 = vsel %vm50, %v1135, 0
    %v1157 = vsel %vm50, %v1136, 0
    %v1160 = vsel %vm50, %v1137, 0
    %v1163 = vsel %vm50, %v1138, 0
    %v1166 = vsel %vm50, %v1139, 0
    %v1169 = vsel %vm50, %v1140, 0
    %v1172 = vsel %vm50, %v1141, 0
    %v1175 = vsel %vm50, %v1142, 0
    %v1178 = vsel %vm50, %v1143, 0
    %v1181 = vsel %vm50, %v1144, 0
    %v1184 = vsel %vm50, %v1145, 0
    %v1187 = vsel %vm50, %v1146, 0
    %v1190 = vsel %vm50, %v1147, 0
    %v1193 = vsel %vm50, %v1148, 0
    %v1196 = vsel %vm50, %v1149, 0
    %v1199 = vsel %vm50, %v1150, 0
    %v1202 = vsel %vm99, %v1152, 0
    %1204 = vmatprep.subr.mxu0 0.0
    %1205 = vmatpush1.msra.mxu0 %v1202
    %1206 = vmatprep.subr.mxu0 0.0
    %1207 = vmatpush1.msra.mxu0 0.0
    %1208 = vmatprep.subr.mxu0 0.0
    %1209 = vmatpush1.msra.mxu0 0.0
    %1210 = vmatprep.subr.mxu0 0.0
    %1211 = vmatpush1.msra.mxu0 0.0
    %1212 = vmatprep.subr.mxu0 0.0
    %1213 = vmatpush1.msra.mxu0 0.0
    %1214 = vmatprep.subr.mxu0 0.0
    %1215 = vmatpush1.msra.mxu0 0.0
    %1216 = vmatprep.subr.mxu0 0.0
    %1217 = vmatpush1.msra.mxu0 0.0
    %1218 = vmatprep.subr.mxu0 0.0
    %1219 = vmatpush1.msra.mxu0 0.0
    %1220 = vmatprep.subr.mxu0 0.0
    %1221 = vmatpush1.msra.mxu0 0.0
    %1222 = vmatprep.subr.mxu0 0.0
    %1223 = vmatpush1.msra.mxu0 0.0
    %1224 = vmatprep.subr.mxu0 0.0
    %1225 = vmatpush1.msra.mxu0 0.0
    %1226 = vmatprep.subr.mxu0 0.0
    %1227 = vmatpush1.msra.mxu0 0.0
    %1228 = vmatprep.subr.mxu0 0.0
    %1229 = vmatpush1.msra.mxu0 0.0
    %1230 = vmatprep.subr.mxu0 0.0
    %1231 = vmatpush1.msra.mxu0 0.0
    %1232 = vmatprep.subr.mxu0 0.0
    %1233 = vmatpush1.msra.mxu0 0.0
    %1234 = vmatprep.subr.mxu0 0.0
    %1235 = vmatpush1.msra.mxu0 0.0
    %1236 = vmatprep.subr.mxu0 0.0
    %1237 = vmatpush1.msra.mxu0 0.0
    %1238 = vmatprep.subr.mxu0 0.0
    %1239 = vmatpush1.msra.mxu0 0.0
    %1240 = vmatprep.subr.mxu0 0.0
    %1241 = vmatpush1.msra.mxu0 0.0
    %1242 = vmatprep.subr.mxu0 0.0
    %1243 = vmatpush1.msra.mxu0 0.0
    %1244 = vmatprep.subr.mxu0 0.0
    %1245 = vmatpush1.msra.mxu0 0.0
    %1246 = vmatprep.subr.mxu0 0.0
    %1247 = vmatpush1.msra.mxu0 0.0
    %1248 = vmatprep.subr.mxu0 0.0
    %1249 = vmatpush1.msra.mxu0 0.0
    %1250 = vmatprep.subr.mxu0 0.0
    %1251 = vmatpush1.msra.mxu0 0.0
    %1252 = vmatprep.subr.mxu0 0.0
    %1253 = vmatpush1.msra.mxu0 0.0
    %1254 = vmatprep.subr.mxu0 0.0
    %1255 = vmatpush1.msra.mxu0 0.0
    %1256 = vmatprep.subr.mxu0 0.0
    %1257 = vmatpush1.msra.mxu0 0.0
    %1258 = vmatprep.subr.mxu0 0.0
    %1259 = vmatpush1.msra.mxu0 0.0
    %1260 = vmatprep.subr.mxu0 0.0
    %1261 = vmatpush1.msra.mxu0 0.0
    %1262 = vmatprep.subr.mxu0 0.0
    %1263 = vmatpush1.msra.mxu0 0.0
    %1264 = vmatprep.subr.mxu0 0.0
    %1265 = vmatpush1.msra.mxu0 0.0
    %1266 = vmatprep.subr.mxu0 0.0
    %1267 = vmatpush1.msra.mxu0 0.0
    %1268 = vmatprep.mubr.f32.mxu0 0.0
    %1269 = vmatmul.mubr.f32.gmra.mrb[0].mxu0 %v1154
    %v1270 = vpop.f32.mrb[0].mxu0
    %v1271 = vadd.f32 0.0, %v1270
    %v1272 = vpop.f32.mrb[0].mxu0
    %1273 = vmatprep.mubr.f32.mxu0 0.0
    %1274 = vmatmul.mubr.f32.gmra.mrb[0].mxu0 %v1157
    %v1275 = vpop.f32.mrb[0].mxu0
    %v1276 = vadd.f32 0.0, %v1275
    %v1277 = vpop.f32.mrb[0].mxu0
    %1278 = vmatprep.mubr.f32.mxu0 0.0
    %1279 = vmatmul.mubr.f32.gmra.mrb[0].mxu0 %v1160
    %v1280 = vpop.f32.mrb[0].mxu0
    %v1281 = vadd.f32 0.0, %v1280
    %v1282 = vpop.f32.mrb[0].mxu0
    %1283 = vmatprep.mubr.f32.mxu0 0.0
    %1284 = vmatmul.mubr.f32.gmra.mrb[0].mxu0 %v1163
    %v1285 = vpop.f32.mrb[0].mxu0
    %v1286 = vadd.f32 0.0, %v1285
    %v1287 = vpop.f32.mrb[0].mxu0
    %1288 = vmatprep.mubr.f32.mxu0 0.0
    %1289 = vmatmul.mubr.f32.gmra.mrb[0].mxu0 %v1166
    %v1290 = vpop.f32.mrb[0].mxu0
    %v1291 = vadd.f32 0.0, %v1290
    %v1292 = vpop.f32.mrb[0].mxu0
    %1293 = vmatprep.mubr.f32.mxu0 0.0
    %1294 = vmatmul.mubr.f32.gmra.mrb[0].mxu0 %v1169
    %v1295 = vpop.f32.mrb[0].mxu0
    %v1296 = vadd.f32 0.0, %v1295
    %v1297 = vpop.f32.mrb[0].mxu0
    %1298 = vmatprep.mubr.f32.mxu0 0.0
    %1299 = vmatmul.mubr.f32.gmra.mrb[0].mxu0 %v1172
    %v1300 = vpop.f32.mrb[0].mxu0
    %v1301 = vadd.f32 0.0, %v1300
    %v1302 = vpop.f32.mrb[0].mxu0
    %1303 = vmatprep.mubr.f32.mxu0 0.0
    %1304 = vmatmul.mubr.f32.gmra.mrb[0].mxu0 %v1175
    %v1305 = vpop.f32.mrb[0].mxu0
    %v1306 = vadd.f32 0.0, %v1305
    %v1307 = vpop.f32.mrb[0].mxu0
    %1308 = vmatprep.mubr.f32.mxu0 0.0
    %1309 = vmatmul.mubr.f32.gmra.mrb[0].mxu0 %v1178
    %v1310 = vpop.f32.mrb[0].mxu0
    %v1311 = vadd.f32 0.0, %v1310
    %v1312 = vpop.f32.mrb[0].mxu0
    %1313 = vmatprep.mubr.f32.mxu0 0.0
    %1314 = vmatmul.mubr.f32.gmra.mrb[0].mxu0 %v1181
    %v1315 = vpop.f32.mrb[0].mxu0
    %v1316 = vadd.f32 0.0, %v1315
    %v1317 = vpop.f32.mrb[0].mxu0
    %1318 = vmatprep.mubr.f32.mxu0 0.0
    %1319 = vmatmul.mubr.f32.gmra.mrb[0].mxu0 %v1184
    %v1320 = vpop.f32.mrb[0].mxu0
    %v1321 = vadd.f32 0.0, %v1320
    %v1322 = vpop.f32.mrb[0].mxu0
    %1323 = vmatprep.mubr.f32.mxu0 0.0
    %1324 = vmatmul.mubr.f32.gmra.mrb[0].mxu0 %v1187
    %v1325 = vpop.f32.mrb[0].mxu0
    %v1326 = vadd.f32 0.0, %v1325
    %v1327 = vpop.f32.mrb[0].mxu0
    %1328 = vmatprep.mubr.f32.mxu0 0.0
    %1329 = vmatmul.mubr.f32.gmra.mrb[0].mxu0 %v1190
    %v1330 = vpop.f32.mrb[0].mxu0
    %v1331 = vadd.f32 0.0, %v1330
    %v1332 = vpop.f32.mrb[0].mxu0
    %1333 = vmatprep.mubr.f32.mxu0 0.0
    %1334 = vmatmul.mubr.f32.gmra.mrb[0].mxu0 %v1193
    %v1335 = vpop.f32.mrb[0].mxu0
    %v1336 = vadd.f32 0.0, %v1335
    %v1337 = vpop.f32.mrb[0].mxu0
    %1338 = vmatprep.mubr.f32.mxu0 0.0
    %1339 = vmatmul.mubr.f32.gmra.mrb[0].mxu0 %v1196
    %v1340 = vpop.f32.mrb[0].mxu0
    %v1341 = vadd.f32 0.0, %v1340
    %v1342 = vpop.f32.mrb[0].mxu0
    %1343 = vmatprep.mubr.f32.mxu0 0.0
    %1344 = vmatmul.mubr.f32.gmra.mrb[0].mxu0 %v1199
    %v1345 = vpop.f32.mrb[0].mxu0
    %v1346 = vadd.f32 0.0, %v1345
    %v1347 = vpop.f32.mrb[0].mxu0
    %1348 = vdwg.mxu0
    %v1349 = vadd.f32 %v1119, %v1271
    %v1350 = vadd.f32 %v1120, %v1276
    %v1351 = vadd.f32 %v1121, %v1281
    %v1352 = vadd.f32 %v1122, %v1286
    %v1353 = vadd.f32 %v1123, %v1291
    %v1354 = vadd.f32 %v1124, %v1296
    %v1355 = vadd.f32 %v1125, %v1301
    %v1356 = vadd.f32 %v1126, %v1306
    %v1357 = vadd.f32 %v1127, %v1311
    %v1358 = vadd.f32 %v1128, %v1316
    %v1359 = vadd.f32 %v1129, %v1321
    %v1360 = vadd.f32 %v1130, %v1326
    %v1361 = vadd.f32 %v1131, %v1331
    %v1362 = vadd.f32 %v1132, %v1336
    %v1363 = vadd.f32 %v1133, %v1341
    %v1364 = vadd.f32 %v1134, %v1346
    %s1365 = scalar_lea.vmem %s0, 32
    %v1366 = vld [vmem:[%s1365] sm:$0xff]
    %v1367 = vld [vmem:[%s1365 + $0x10] sm:$0xff]
    %v1368 = vld [vmem:[%s1365 + $0x20] sm:$0xff]
    %v1369 = vld [vmem:[%s1365 + $0x30] sm:$0xff]
    %v1370 = vld [vmem:[%s1365 + $0x40] sm:$0xff]
    %v1371 = vld [vmem:[%s1365 + $0x50] sm:$0xff]
    %v1372 = vld [vmem:[%s1365 + $0x60] sm:$0xff]
    %v1373 = vld [vmem:[%s1365 + $0x70] sm:$0xff]
    %v1374 = vld [vmem:[%s1365 + $0xa0] sm:$0xff]
    %v1375 = vld [vmem:[%s1365 + $0xb0] sm:$0xff]
    %v1376 = vld [vmem:[%s1365 + $0xc0] sm:$0xff]
    %v1377 = vld [vmem:[%s1365 + $0xd0] sm:$0xff]
    %v1378 = vld [vmem:[%s1365 + $0xe0] sm:$0xff]
    %v1379 = vld [vmem:[%s1365 + $0xf0] sm:$0xff]
    %v1380 = vld [vmem:[%s1365 + $0x100] sm:$0xff]
    %v1381 = vld [vmem:[%s1365 + $0x110] sm:$0xff]
    %s1382 = scalar_lea.vmem %s1, 24
    %v1383 = vld [vmem:[%s1382] sm:$0xf]
    %v1385 = vsel %vm50, %v1366, 0
    %v1388 = vsel %vm50, %v1367, 0
    %v1391 = vsel %vm50, %v1368, 0
    %v1394 = vsel %vm50, %v1369, 0
    %v1397 = vsel %vm50, %v1370, 0
    %v1400 = vsel %vm50, %v1371, 0
    %v1403 = vsel %vm50, %v1372, 0
    %v1406 = vsel %vm50, %v1373, 0
    %v1409 = vsel %vm50, %v1374, 0
    %v1412 = vsel %vm50, %v1375, 0
    %v1415 = vsel %vm50, %v1376, 0
    %v1418 = vsel %vm50, %v1377, 0
    %v1421 = vsel %vm50, %v1378, 0
    %v1424 = vsel %vm50, %v1379, 0
    %v1427 = vsel %vm50, %v1380, 0
    %v1430 = vsel %vm50, %v1381, 0
    %v1433 = vsel %vm99, %v1383, 0
    %1435 = vmatprep.subr.mxu0 0.0
    %1436 = vmatpush1.msra.mxu0 %v1433
    %1437 = vmatprep.subr.mxu0 0.0
    %1438 = vmatpush1.msra.mxu0 0.0
    %1439 = vmatprep.subr.mxu0 0.0
    %1440 = vmatpush1.msra.mxu0 0.0
    %1441 = vmatprep.subr.mxu0 0.0
    %1442 = vmatpush1.msra.mxu0 0.0
    %1443 = vmatprep.subr.mxu0 0.0
    %1444 = vmatpush1.msra.mxu0 0.0
    %1445 = vmatprep.subr.mxu0 0.0
    %1446 = vmatpush1.msra.mxu0 0.0
    %1447 = vmatprep.subr.mxu0 0.0
    %1448 = vmatpush1.msra.mxu0 0.0
    %1449 = vmatprep.subr.mxu0 0.0
    %1450 = vmatpush1.msra.mxu0 0.0
    %1451 = vmatprep.subr.mxu0 0.0
    %1452 = vmatpush1.msra.mxu0 0.0
    %1453 = vmatprep.subr.mxu0 0.0
    %1454 = vmatpush1.msra.mxu0 0.0
    %1455 = vmatprep.subr.mxu0 0.0
    %1456 = vmatpush1.msra.mxu0 0.0
    %1457 = vmatprep.subr.mxu0 0.0
    %1458 = vmatpush1.msra.mxu0 0.0
    %1459 = vmatprep.subr.mxu0 0.0
    %1460 = vmatpush1.msra.mxu0 0.0
    %1461 = vmatprep.subr.mxu0 0.0
    %1462 = vmatpush1.msra.mxu0 0.0
    %1463 = vmatprep.subr.mxu0 0.0
    %1464 = vmatpush1.msra.mxu0 0.0
    %1465 = vmatprep.subr.mxu0 0.0
    %1466 = vmatpush1.msra.mxu0 0.0
    %1467 = vmatprep.subr.mxu0 0.0
    %1468 = vmatpush1.msra.mxu0 0.0
    %1469 = vmatprep.subr.mxu0 0.0
    %1470 = vmatpush1.msra.mxu0 0.0
    %1471 = vmatprep.subr.mxu0 0.0
    %1472 = vmatpush1.msra.mxu0 0.0
    %1473 = vmatprep.subr.mxu0 0.0
    %1474 = vmatpush1.msra.mxu0 0.0
    %1475 = vmatprep.subr.mxu0 0.0
    %1476 = vmatpush1.msra.mxu0 0.0
    %1477 = vmatprep.subr.mxu0 0.0
    %1478 = vmatpush1.msra.mxu0 0.0
    %1479 = vmatprep.subr.mxu0 0.0
    %1480 = vmatpush1.msra.mxu0 0.0
    %1481 = vmatprep.subr.mxu0 0.0
    %1482 = vmatpush1.msra.mxu0 0.0
    %1483 = vmatprep.subr.mxu0 0.0
    %1484 = vmatpush1.msra.mxu0 0.0
    %1485 = vmatprep.subr.mxu0 0.0
    %1486 = vmatpush1.msra.mxu0 0.0
    %1487 = vmatprep.subr.mxu0 0.0
    %1488 = vmatpush1.msra.mxu0 0.0
    %1489 = vmatprep.subr.mxu0 0.0
    %1490 = vmatpush1.msra.mxu0 0.0
    %1491 = vmatprep.subr.mxu0 0.0
    %1492 = vmatpush1.msra.mxu0 0.0
    %1493 = vmatprep.subr.mxu0 0.0
    %1494 = vmatpush1.msra.mxu0 0.0
    %1495 = vmatprep.subr.mxu0 0.0
    %1496 = vmatpush1.msra.mxu0 0.0
    %1497 = vmatprep.subr.mxu0 0.0
    %1498 = vmatpush1.msra.mxu0 0.0
    %1499 = vmatprep.mubr.f32.mxu0 0.0
    %1500 = vmatmul.mubr.f32.gmra.mrb[0].mxu0 %v1385
    %v1501 = vpop.f32.mrb[0].mxu0
    %v1502 = vadd.f32 0.0, %v1501
    %v1503 = vpop.f32.mrb[0].mxu0
    %1504 = vmatprep.mubr.f32.mxu0 0.0
    %1505 = vmatmul.mubr.f32.gmra.mrb[0].mxu0 %v1388
    %v1506 = vpop.f32.mrb[0].mxu0
    %v1507 = vadd.f32 0.0, %v1506
    %v1508 = vpop.f32.mrb[0].mxu0
    %1509 = vmatprep.mubr.f32.mxu0 0.0
    %1510 = vmatmul.mubr.f32.gmra.mrb[0].mxu0 %v1391
    %v1511 = vpop.f32.mrb[0].mxu0
    %v1512 = vadd.f32 0.0, %v1511
    %v1513 = vpop.f32.mrb[0].mxu0
    %1514 = vmatprep.mubr.f32.mxu0 0.0
    %1515 = vmatmul.mubr.f32.gmra.mrb[0].mxu0 %v1394
    %v1516 = vpop.f32.mrb[0].mxu0
    %v1517 = vadd.f32 0.0, %v1516
    %v1518 = vpop.f32.mrb[0].mxu0
    %1519 = vmatprep.mubr.f32.mxu0 0.0
    %1520 = vmatmul.mubr.f32.gmra.mrb[0].mxu0 %v1397
    %v1521 = vpop.f32.mrb[0].mxu0
    %v1522 = vadd.f32 0.0, %v1521
    %v1523 = vpop.f32.mrb[0].mxu0
    %1524 = vmatprep.mubr.f32.mxu0 0.0
    %1525 = vmatmul.mubr.f32.gmra.mrb[0].mxu0 %v1400
    %v1526 = vpop.f32.mrb[0].mxu0
    %v1527 = vadd.f32 0.0, %v1526
    %v1528 = vpop.f32.mrb[0].mxu0
    %1529 = vmatprep.mubr.f32.mxu0 0.0
    %1530 = vmatmul.mubr.f32.gmra.mrb[0].mxu0 %v1403
    %v1531 = vpop.f32.mrb[0].mxu0
    %v1532 = vadd.f32 0.0, %v1531
    %v1533 = vpop.f32.mrb[0].mxu0
    %1534 = vmatprep.mubr.f32.mxu0 0.0
    %1535 = vmatmul.mubr.f32.gmra.mrb[0].mxu0 %v1406
    %v1536 = vpop.f32.mrb[0].mxu0
    %v1537 = vadd.f32 0.0, %v1536
    %v1538 = vpop.f32.mrb[0].mxu0
    %1539 = vmatprep.mubr.f32.mxu0 0.0
    %1540 = vmatmul.mubr.f32.gmra.mrb[0].mxu0 %v1409
    %v1541 = vpop.f32.mrb[0].mxu0
    %v1542 = vadd.f32 0.0, %v1541
    %v1543 = vpop.f32.mrb[0].mxu0
    %1544 = vmatprep.mubr.f32.mxu0 0.0
    %1545 = vmatmul.mubr.f32.gmra.mrb[0].mxu0 %v1412
    %v1546 = vpop.f32.mrb[0].mxu0
    %v1547 = vadd.f32 0.0, %v1546
    %v1548 = vpop.f32.mrb[0].mxu0
    %1549 = vmatprep.mubr.f32.mxu0 0.0
    %1550 = vmatmul.mubr.f32.gmra.mrb[0].mxu0 %v1415
    %v1551 = vpop.f32.mrb[0].mxu0
    %v1552 = vadd.f32 0.0, %v1551
    %v1553 = vpop.f32.mrb[0].mxu0
    %1554 = vmatprep.mubr.f32.mxu0 0.0
    %1555 = vmatmul.mubr.f32.gmra.mrb[0].mxu0 %v1418
    %v1556 = vpop.f32.mrb[0].mxu0
    %v1557 = vadd.f32 0.0, %v1556
    %v1558 = vpop.f32.mrb[0].mxu0
    %1559 = vmatprep.mubr.f32.mxu0 0.0
    %1560 = vmatmul.mubr.f32.gmra.mrb[0].mxu0 %v1421
    %v1561 = vpop.f32.mrb[0].mxu0
    %v1562 = vadd.f32 0.0, %v1561
    %v1563 = vpop.f32.mrb[0].mxu0
    %1564 = vmatprep.mubr.f32.mxu0 0.0
    %1565 = vmatmul.mubr.f32.gmra.mrb[0].mxu0 %v1424
    %v1566 = vpop.f32.mrb[0].mxu0
    %v1567 = vadd.f32 0.0, %v1566
    %v1568 = vpop.f32.mrb[0].mxu0
    %1569 = vmatprep.mubr.f32.mxu0 0.0
    %1570 = vmatmul.mubr.f32.gmra.mrb[0].mxu0 %v1427
    %v1571 = vpop.f32.mrb[0].mxu0
    %v1572 = vadd.f32 0.0, %v1571
    %v1573 = vpop.f32.mrb[0].mxu0
    %1574 = vmatprep.mubr.f32.mxu0 0.0
    %1575 = vmatmul.mubr.f32.gmra.mrb[0].mxu0 %v1430
    %v1576 = vpop.f32.mrb[0].mxu0
    %v1577 = vadd.f32 0.0, %v1576
    %v1578 = vpop.f32.mrb[0].mxu0
    %1579 = vdwg.mxu0
    %v1580 = vadd.f32 %v1349, %v1502
    %v1581 = vadd.f32 %v1350, %v1507
    %v1582 = vadd.f32 %v1351, %v1512
    %v1583 = vadd.f32 %v1352, %v1517
    %v1584 = vadd.f32 %v1353, %v1522
    %v1585 = vadd.f32 %v1354, %v1527
    %v1586 = vadd.f32 %v1355, %v1532
    %v1587 = vadd.f32 %v1356, %v1537
    %v1588 = vadd.f32 %v1357, %v1542
    %v1589 = vadd.f32 %v1358, %v1547
    %v1590 = vadd.f32 %v1359, %v1552
    %v1591 = vadd.f32 %v1360, %v1557
    %v1592 = vadd.f32 %v1361, %v1562
    %v1593 = vadd.f32 %v1362, %v1567
    %v1594 = vadd.f32 %v1363, %v1572
    %v1595 = vadd.f32 %v1364, %v1577
    %v1596 = vld [vmem:[%s1365 + $0x1] sm:$0xff]
    %v1597 = vld [vmem:[%s1365 + $0x11] sm:$0xff]
    %v1598 = vld [vmem:[%s1365 + $0x21] sm:$0xff]
    %v1599 = vld [vmem:[%s1365 + $0x31] sm:$0xff]
    %v1600 = vld [vmem:[%s1365 + $0x41] sm:$0xff]
    %v1601 = vld [vmem:[%s1365 + $0x51] sm:$0xff]
    %v1602 = vld [vmem:[%s1365 + $0x61] sm:$0xff]
    %v1603 = vld [vmem:[%s1365 + $0x71] sm:$0xff]
    %v1604 = vld [vmem:[%s1365 + $0xa1] sm:$0xff]
    %v1605 = vld [vmem:[%s1365 + $0xb1] sm:$0xff]
    %v1606 = vld [vmem:[%s1365 + $0xc1] sm:$0xff]
    %v1607 = vld [vmem:[%s1365 + $0xd1] sm:$0xff]
    %v1608 = vld [vmem:[%s1365 + $0xe1] sm:$0xff]
    %v1609 = vld [vmem:[%s1365 + $0xf1] sm:$0xff]
    %v1610 = vld [vmem:[%s1365 + $0x101] sm:$0xff]
    %v1611 = vld [vmem:[%s1365 + $0x111] sm:$0xff]
    %s1612 = scalar_lea.vmem %s1, 28
    %v1613 = vld [vmem:[%s1612] sm:$0xf]
    %v1615 = vsel %vm50, %v1596, 0
    %v1618 = vsel %vm50, %v1597, 0
    %v1621 = vsel %vm50, %v1598, 0
    %v1624 = vsel %vm50, %v1599, 0
    %v1627 = vsel %vm50, %v1600, 0
    %v1630 = vsel %vm50, %v1601, 0
    %v1633 = vsel %vm50, %v1602, 0
    %v1636 = vsel %vm50, %v1603, 0
    %v1639 = vsel %vm50, %v1604, 0
    %v1642 = vsel %vm50, %v1605, 0
    %v1645 = vsel %vm50, %v1606, 0
    %v1648 = vsel %vm50, %v1607, 0
    %v1651 = vsel %vm50, %v1608, 0
    %v1654 = vsel %vm50, %v1609, 0
    %v1657 = vsel %vm50, %v1610, 0
    %v1660 = vsel %vm50, %v1611, 0
    %v1663 = vsel %vm99, %v1613, 0
    %1665 = vmatprep.subr.mxu0 0.0
    %1666 = vmatpush1.msra.mxu0 %v1663
    %1667 = vmatprep.subr.mxu0 0.0
    %1668 = vmatpush1.msra.mxu0 0.0
    %1669 = vmatprep.subr.mxu0 0.0
    %1670 = vmatpush1.msra.mxu0 0.0
    %1671 = vmatprep.subr.mxu0 0.0
    %1672 = vmatpush1.msra.mxu0 0.0
    %1673 = vmatprep.subr.mxu0 0.0
    %1674 = vmatpush1.msra.mxu0 0.0
    %1675 = vmatprep.subr.mxu0 0.0
    %1676 = vmatpush1.msra.mxu0 0.0
    %1677 = vmatprep.subr.mxu0 0.0
    %1678 = vmatpush1.msra.mxu0 0.0
    %1679 = vmatprep.subr.mxu0 0.0
    %1680 = vmatpush1.msra.mxu0 0.0
    %1681 = vmatprep.subr.mxu0 0.0
    %1682 = vmatpush1.msra.mxu0 0.0
    %1683 = vmatprep.subr.mxu0 0.0
    %1684 = vmatpush1.msra.mxu0 0.0
    %1685 = vmatprep.subr.mxu0 0.0
    %1686 = vmatpush1.msra.mxu0 0.0
    %1687 = vmatprep.subr.mxu0 0.0
    %1688 = vmatpush1.msra.mxu0 0.0
    %1689 = vmatprep.subr.mxu0 0.0
    %1690 = vmatpush1.msra.mxu0 0.0
    %1691 = vmatprep.subr.mxu0 0.0
    %1692 = vmatpush1.msra.mxu0 0.0
    %1693 = vmatprep.subr.mxu0 0.0
    %1694 = vmatpush1.msra.mxu0 0.0
    %1695 = vmatprep.subr.mxu0 0.0
    %1696 = vmatpush1.msra.mxu0 0.0
    %1697 = vmatprep.subr.mxu0 0.0
    %1698 = vmatpush1.msra.mxu0 0.0
    %1699 = vmatprep.subr.mxu0 0.0
    %1700 = vmatpush1.msra.mxu0 0.0
    %1701 = vmatprep.subr.mxu0 0.0
    %1702 = vmatpush1.msra.mxu0 0.0
    %1703 = vmatprep.subr.mxu0 0.0
    %1704 = vmatpush1.msra.mxu0 0.0
    %1705 = vmatprep.subr.mxu0 0.0
    %1706 = vmatpush1.msra.mxu0 0.0
    %1707 = vmatprep.subr.mxu0 0.0
    %1708 = vmatpush1.msra.mxu0 0.0
    %1709 = vmatprep.subr.mxu0 0.0
    %1710 = vmatpush1.msra.mxu0 0.0
    %1711 = vmatprep.subr.mxu0 0.0
    %1712 = vmatpush1.msra.mxu0 0.0
    %1713 = vmatprep.subr.mxu0 0.0
    %1714 = vmatpush1.msra.mxu0 0.0
    %1715 = vmatprep.subr.mxu0 0.0
    %1716 = vmatpush1.msra.mxu0 0.0
    %1717 = vmatprep.subr.mxu0 0.0
    %1718 = vmatpush1.msra.mxu0 0.0
    %1719 = vmatprep.subr.mxu0 0.0
    %1720 = vmatpush1.msra.mxu0 0.0
    %1721 = vmatprep.subr.mxu0 0.0
    %1722 = vmatpush1.msra.mxu0 0.0
    %1723 = vmatprep.subr.mxu0 0.0
    %1724 = vmatpush1.msra.mxu0 0.0
    %1725 = vmatprep.subr.mxu0 0.0
    %1726 = vmatpush1.msra.mxu0 0.0
    %1727 = vmatprep.subr.mxu0 0.0
    %1728 = vmatpush1.msra.mxu0 0.0
    %1729 = vmatprep.mubr.f32.mxu0 0.0
    %1730 = vmatmul.mubr.f32.gmra.mrb[0].mxu0 %v1615
    %v1731 = vpop.f32.mrb[0].mxu0
    %v1732 = vadd.f32 0.0, %v1731
    %v1733 = vpop.f32.mrb[0].mxu0
    %1734 = vmatprep.mubr.f32.mxu0 0.0
    %1735 = vmatmul.mubr.f32.gmra.mrb[0].mxu0 %v1618
    %v1736 = vpop.f32.mrb[0].mxu0
    %v1737 = vadd.f32 0.0, %v1736
    %v1738 = vpop.f32.mrb[0].mxu0
    %1739 = vmatprep.mubr.f32.mxu0 0.0
    %1740 = vmatmul.mubr.f32.gmra.mrb[0].mxu0 %v1621
    %v1741 = vpop.f32.mrb[0].mxu0
    %v1742 = vadd.f32 0.0, %v1741
    %v1743 = vpop.f32.mrb[0].mxu0
    %1744 = vmatprep.mubr.f32.mxu0 0.0
    %1745 = vmatmul.mubr.f32.gmra.mrb[0].mxu0 %v1624
    %v1746 = vpop.f32.mrb[0].mxu0
    %v1747 = vadd.f32 0.0, %v1746
    %v1748 = vpop.f32.mrb[0].mxu0
    %1749 = vmatprep.mubr.f32.mxu0 0.0
    %1750 = vmatmul.mubr.f32.gmra.mrb[0].mxu0 %v1627
    %v1751 = vpop.f32.mrb[0].mxu0
    %v1752 = vadd.f32 0.0, %v1751
    %v1753 = vpop.f32.mrb[0].mxu0
    %1754 = vmatprep.mubr.f32.mxu0 0.0
    %1755 = vmatmul.mubr.f32.gmra.mrb[0].mxu0 %v1630
    %v1756 = vpop.f32.mrb[0].mxu0
    %v1757 = vadd.f32 0.0, %v1756
    %v1758 = vpop.f32.mrb[0].mxu0
    %1759 = vmatprep.mubr.f32.mxu0 0.0
    %1760 = vmatmul.mubr.f32.gmra.mrb[0].mxu0 %v1633
    %v1761 = vpop.f32.mrb[0].mxu0
    %v1762 = vadd.f32 0.0, %v1761
    %v1763 = vpop.f32.mrb[0].mxu0
    %1764 = vmatprep.mubr.f32.mxu0 0.0
    %1765 = vmatmul.mubr.f32.gmra.mrb[0].mxu0 %v1636
    %v1766 = vpop.f32.mrb[0].mxu0
    %v1767 = vadd.f32 0.0, %v1766
    %v1768 = vpop.f32.mrb[0].mxu0
    %1769 = vmatprep.mubr.f32.mxu0 0.0
    %1770 = vmatmul.mubr.f32.gmra.mrb[0].mxu0 %v1639
    %v1771 = vpop.f32.mrb[0].mxu0
    %v1772 = vadd.f32 0.0, %v1771
    %v1773 = vpop.f32.mrb[0].mxu0
    %1774 = vmatprep.mubr.f32.mxu0 0.0
    %1775 = vmatmul.mubr.f32.gmra.mrb[0].mxu0 %v1642
    %v1776 = vpop.f32.mrb[0].mxu0
    %v1777 = vadd.f32 0.0, %v1776
    %v1778 = vpop.f32.mrb[0].mxu0
    %1779 = vmatprep.mubr.f32.mxu0 0.0
    %1780 = vmatmul.mubr.f32.gmra.mrb[0].mxu0 %v1645
    %v1781 = vpop.f32.mrb[0].mxu0
    %v1782 = vadd.f32 0.0, %v1781
    %v1783 = vpop.f32.mrb[0].mxu0
    %1784 = vmatprep.mubr.f32.mxu0 0.0
    %1785 = vmatmul.mubr.f32.gmra.mrb[0].mxu0 %v1648
    %v1786 = vpop.f32.mrb[0].mxu0
    %v1787 = vadd.f32 0.0, %v1786
    %v1788 = vpop.f32.mrb[0].mxu0
    %1789 = vmatprep.mubr.f32.mxu0 0.0
    %1790 = vmatmul.mubr.f32.gmra.mrb[0].mxu0 %v1651
    %v1791 = vpop.f32.mrb[0].mxu0
    %v1792 = vadd.f32 0.0, %v1791
    %v1793 = vpop.f32.mrb[0].mxu0
    %1794 = vmatprep.mubr.f32.mxu0 0.0
    %1795 = vmatmul.mubr.f32.gmra.mrb[0].mxu0 %v1654
    %v1796 = vpop.f32.mrb[0].mxu0
    %v1797 = vadd.f32 0.0, %v1796
    %v1798 = vpop.f32.mrb[0].mxu0
    %1799 = vmatprep.mubr.f32.mxu0 0.0
    %1800 = vmatmul.mubr.f32.gmra.mrb[0].mxu0 %v1657
    %v1801 = vpop.f32.mrb[0].mxu0
    %v1802 = vadd.f32 0.0, %v1801
    %v1803 = vpop.f32.mrb[0].mxu0
    %1804 = vmatprep.mubr.f32.mxu0 0.0
    %1805 = vmatmul.mubr.f32.gmra.mrb[0].mxu0 %v1660
    %v1806 = vpop.f32.mrb[0].mxu0
    %v1807 = vadd.f32 0.0, %v1806
    %v1808 = vpop.f32.mrb[0].mxu0
    %1809 = vdwg.mxu0
    %v1810 = vadd.f32 %v1580, %v1732
    %v1811 = vadd.f32 %v1581, %v1737
    %v1812 = vadd.f32 %v1582, %v1742
    %v1813 = vadd.f32 %v1583, %v1747
    %v1814 = vadd.f32 %v1584, %v1752
    %v1815 = vadd.f32 %v1585, %v1757
    %v1816 = vadd.f32 %v1586, %v1762
    %v1817 = vadd.f32 %v1587, %v1767
    %v1818 = vadd.f32 %v1588, %v1772
    %v1819 = vadd.f32 %v1589, %v1777
    %v1820 = vadd.f32 %v1590, %v1782
    %v1821 = vadd.f32 %v1591, %v1787
    %v1822 = vadd.f32 %v1592, %v1792
    %v1823 = vadd.f32 %v1593, %v1797
    %v1824 = vadd.f32 %v1594, %v1802
    %v1825 = vadd.f32 %v1595, %v1807
    %v1826 = vld [vmem:[%s1365 + $0x2] sm:$0xff]
    %v1827 = vld [vmem:[%s1365 + $0x12] sm:$0xff]
    %v1828 = vld [vmem:[%s1365 + $0x22] sm:$0xff]
    %v1829 = vld [vmem:[%s1365 + $0x32] sm:$0xff]
    %v1830 = vld [vmem:[%s1365 + $0x42] sm:$0xff]
    %v1831 = vld [vmem:[%s1365 + $0x52] sm:$0xff]
    %v1832 = vld [vmem:[%s1365 + $0x62] sm:$0xff]
    %v1833 = vld [vmem:[%s1365 + $0x72] sm:$0xff]
    %v1834 = vld [vmem:[%s1365 + $0xa2] sm:$0xff]
    %v1835 = vld [vmem:[%s1365 + $0xb2] sm:$0xff]
    %v1836 = vld [vmem:[%s1365 + $0xc2] sm:$0xff]
    %v1837 = vld [vmem:[%s1365 + $0xd2] sm:$0xff]
    %v1838 = vld [vmem:[%s1365 + $0xe2] sm:$0xff]
    %v1839 = vld [vmem:[%s1365 + $0xf2] sm:$0xff]
    %v1840 = vld [vmem:[%s1365 + $0x102] sm:$0xff]
    %v1841 = vld [vmem:[%s1365 + $0x112] sm:$0xff]
    %s1842 = scalar_lea.vmem %s1, 32
    %v1843 = vld [vmem:[%s1842] sm:$0xf]
    %v1845 = vsel %vm50, %v1826, 0
    %v1848 = vsel %vm50, %v1827, 0
    %v1851 = vsel %vm50, %v1828, 0
    %v1854 = vsel %vm50, %v1829, 0
    %v1857 = vsel %vm50, %v1830, 0
    %v1860 = vsel %vm50, %v1831, 0
    %v1863 = vsel %vm50, %v1832, 0
    %v1866 = vsel %vm50, %v1833, 0
    %v1869 = vsel %vm50, %v1834, 0
    %v1872 = vsel %vm50, %v1835, 0
    %v1875 = vsel %vm50, %v1836, 0
    %v1878 = vsel %vm50, %v1837, 0
    %v1881 = vsel %vm50, %v1838, 0
    %v1884 = vsel %vm50, %v1839, 0
    %v1887 = vsel %vm50, %v1840, 0
    %v1890 = vsel %vm50, %v1841, 0
    %v1893 = vsel %vm99, %v1843, 0
    %1895 = vmatprep.subr.mxu0 0.0
    %1896 = vmatpush1.msra.mxu0 %v1893
    %1897 = vmatprep.subr.mxu0 0.0
    %1898 = vmatpush1.msra.mxu0 0.0
    %1899 = vmatprep.subr.mxu0 0.0
    %1900 = vmatpush1.msra.mxu0 0.0
    %1901 = vmatprep.subr.mxu0 0.0
    %1902 = vmatpush1.msra.mxu0 0.0
    %1903 = vmatprep.subr.mxu0 0.0
    %1904 = vmatpush1.msra.mxu0 0.0
    %1905 = vmatprep.subr.mxu0 0.0
    %1906 = vmatpush1.msra.mxu0 0.0
    %1907 = vmatprep.subr.mxu0 0.0
    %1908 = vmatpush1.msra.mxu0 0.0
    %1909 = vmatprep.subr.mxu0 0.0
    %1910 = vmatpush1.msra.mxu0 0.0
    %1911 = vmatprep.subr.mxu0 0.0
    %1912 = vmatpush1.msra.mxu0 0.0
    %1913 = vmatprep.subr.mxu0 0.0
    %1914 = vmatpush1.msra.mxu0 0.0
    %1915 = vmatprep.subr.mxu0 0.0
    %1916 = vmatpush1.msra.mxu0 0.0
    %1917 = vmatprep.subr.mxu0 0.0
    %1918 = vmatpush1.msra.mxu0 0.0
    %1919 = vmatprep.subr.mxu0 0.0
    %1920 = vmatpush1.msra.mxu0 0.0
    %1921 = vmatprep.subr.mxu0 0.0
    %1922 = vmatpush1.msra.mxu0 0.0
    %1923 = vmatprep.subr.mxu0 0.0
    %1924 = vmatpush1.msra.mxu0 0.0
    %1925 = vmatprep.subr.mxu0 0.0
    %1926 = vmatpush1.msra.mxu0 0.0
    %1927 = vmatprep.subr.mxu0 0.0
    %1928 = vmatpush1.msra.mxu0 0.0
    %1929 = vmatprep.subr.mxu0 0.0
    %1930 = vmatpush1.msra.mxu0 0.0
    %1931 = vmatprep.subr.mxu0 0.0
    %1932 = vmatpush1.msra.mxu0 0.0
    %1933 = vmatprep.subr.mxu0 0.0
    %1934 = vmatpush1.msra.mxu0 0.0
    %1935 = vmatprep.subr.mxu0 0.0
    %1936 = vmatpush1.msra.mxu0 0.0
    %1937 = vmatprep.subr.mxu0 0.0
    %1938 = vmatpush1.msra.mxu0 0.0
    %1939 = vmatprep.subr.mxu0 0.0
    %1940 = vmatpush1.msra.mxu0 0.0
    %1941 = vmatprep.subr.mxu0 0.0
    %1942 = vmatpush1.msra.mxu0 0.0
    %1943 = vmatprep.subr.mxu0 0.0
    %1944 = vmatpush1.msra.mxu0 0.0
    %1945 = vmatprep.subr.mxu0 0.0
    %1946 = vmatpush1.msra.mxu0 0.0
    %1947 = vmatprep.subr.mxu0 0.0
    %1948 = vmatpush1.msra.mxu0 0.0
    %1949 = vmatprep.subr.mxu0 0.0
    %1950 = vmatpush1.msra.mxu0 0.0
    %1951 = vmatprep.subr.mxu0 0.0
    %1952 = vmatpush1.msra.mxu0 0.0
    %1953 = vmatprep.subr.mxu0 0.0
    %1954 = vmatpush1.msra.mxu0 0.0
    %1955 = vmatprep.subr.mxu0 0.0
    %1956 = vmatpush1.msra.mxu0 0.0
    %1957 = vmatprep.subr.mxu0 0.0
    %1958 = vmatpush1.msra.mxu0 0.0
    %1959 = vmatprep.mubr.f32.mxu0 0.0
    %1960 = vmatmul.mubr.f32.gmra.mrb[0].mxu0 %v1845
    %v1961 = vpop.f32.mrb[0].mxu0
    %v1962 = vadd.f32 0.0, %v1961
    %v1963 = vpop.f32.mrb[0].mxu0
    %1964 = vmatprep.mubr.f32.mxu0 0.0
    %1965 = vmatmul.mubr.f32.gmra.mrb[0].mxu0 %v1848
    %v1966 = vpop.f32.mrb[0].mxu0
    %v1967 = vadd.f32 0.0, %v1966
    %v1968 = vpop.f32.mrb[0].mxu0
    %1969 = vmatprep.mubr.f32.mxu0 0.0
    %1970 = vmatmul.mubr.f32.gmra.mrb[0].mxu0 %v1851
    %v1971 = vpop.f32.mrb[0].mxu0
    %v1972 = vadd.f32 0.0, %v1971
    %v1973 = vpop.f32.mrb[0].mxu0
    %1974 = vmatprep.mubr.f32.mxu0 0.0
    %1975 = vmatmul.mubr.f32.gmra.mrb[0].mxu0 %v1854
    %v1976 = vpop.f32.mrb[0].mxu0
    %v1977 = vadd.f32 0.0, %v1976
    %v1978 = vpop.f32.mrb[0].mxu0
    %1979 = vmatprep.mubr.f32.mxu0 0.0
    %1980 = vmatmul.mubr.f32.gmra.mrb[0].mxu0 %v1857
    %v1981 = vpop.f32.mrb[0].mxu0
    %v1982 = vadd.f32 0.0, %v1981
    %v1983 = vpop.f32.mrb[0].mxu0
    %1984 = vmatprep.mubr.f32.mxu0 0.0
    %1985 = vmatmul.mubr.f32.gmra.mrb[0].mxu0 %v1860
    %v1986 = vpop.f32.mrb[0].mxu0
    %v1987 = vadd.f32 0.0, %v1986
    %v1988 = vpop.f32.mrb[0].mxu0
    %1989 = vmatprep.mubr.f32.mxu0 0.0
    %1990 = vmatmul.mubr.f32.gmra.mrb[0].mxu0 %v1863
    %v1991 = vpop.f32.mrb[0].mxu0
    %v1992 = vadd.f32 0.0, %v1991
    %v1993 = vpop.f32.mrb[0].mxu0
    %1994 = vmatprep.mubr.f32.mxu0 0.0
    %1995 = vmatmul.mubr.f32.gmra.mrb[0].mxu0 %v1866
    %v1996 = vpop.f32.mrb[0].mxu0
    %v1997 = vadd.f32 0.0, %v1996
    %v1998 = vpop.f32.mrb[0].mxu0
    %1999 = vmatprep.mubr.f32.mxu0 0.0
    %2000 = vmatmul.mubr.f32.gmra.mrb[0].mxu0 %v1869
    %v2001 = vpop.f32.mrb[0].mxu0
    %v2002 = vadd.f32 0.0, %v2001
    %v2003 = vpop.f32.mrb[0].mxu0
    %2004 = vmatprep.mubr.f32.mxu0 0.0
    %2005 = vmatmul.mubr.f32.gmra.mrb[0].mxu0 %v1872
    %v2006 = vpop.f32.mrb[0].mxu0
    %v2007 = vadd.f32 0.0, %v2006
    %v2008 = vpop.f32.mrb[0].mxu0
    %2009 = vmatprep.mubr.f32.mxu0 0.0
    %2010 = vmatmul.mubr.f32.gmra.mrb[0].mxu0 %v1875
    %v2011 = vpop.f32.mrb[0].mxu0
    %v2012 = vadd.f32 0.0, %v2011
    %v2013 = vpop.f32.mrb[0].mxu0
    %2014 = vmatprep.mubr.f32.mxu0 0.0
    %2015 = vmatmul.mubr.f32.gmra.mrb[0].mxu0 %v1878
    %v2016 = vpop.f32.mrb[0].mxu0
    %v2017 = vadd.f32 0.0, %v2016
    %v2018 = vpop.f32.mrb[0].mxu0
    %2019 = vmatprep.mubr.f32.mxu0 0.0
    %2020 = vmatmul.mubr.f32.gmra.mrb[0].mxu0 %v1881
    %v2021 = vpop.f32.mrb[0].mxu0
    %v2022 = vadd.f32 0.0, %v2021
    %v2023 = vpop.f32.mrb[0].mxu0
    %2024 = vmatprep.mubr.f32.mxu0 0.0
    %2025 = vmatmul.mubr.f32.gmra.mrb[0].mxu0 %v1884
    %v2026 = vpop.f32.mrb[0].mxu0
    %v2027 = vadd.f32 0.0, %v2026
    %v2028 = vpop.f32.mrb[0].mxu0
    %2029 = vmatprep.mubr.f32.mxu0 0.0
    %2030 = vmatmul.mubr.f32.gmra.mrb[0].mxu0 %v1887
    %v2031 = vpop.f32.mrb[0].mxu0
    %v2032 = vadd.f32 0.0, %v2031
    %v2033 = vpop.f32.mrb[0].mxu0
    %2034 = vmatprep.mubr.f32.mxu0 0.0
    %2035 = vmatmul.mubr.f32.gmra.mrb[0].mxu0 %v1890
    %v2036 = vpop.f32.mrb[0].mxu0
    %v2037 = vadd.f32 0.0, %v2036
    %v2038 = vpop.f32.mrb[0].mxu0
    %2039 = vdwg.mxu0
    %v2040 = vadd.f32 %v1810, %v1962
    %v2041 = vadd.f32 %v1811, %v1967
    %v2042 = vadd.f32 %v1812, %v1972
    %v2043 = vadd.f32 %v1813, %v1977
    %v2044 = vadd.f32 %v1814, %v1982
    %v2045 = vadd.f32 %v1815, %v1987
    %v2046 = vadd.f32 %v1816, %v1992
    %v2047 = vadd.f32 %v1817, %v1997
    %v2048 = vadd.f32 %v1818, %v2002
    %v2049 = vadd.f32 %v1819, %v2007
    %v2050 = vadd.f32 %v1820, %v2012
    %v2051 = vadd.f32 %v1821, %v2017
    %v2052 = vadd.f32 %v1822, %v2022
    %v2053 = vadd.f32 %v1823, %v2027
    %v2054 = vadd.f32 %v1824, %v2032
    %v2055 = vadd.f32 %v1825, %v2037
    %v2056 = vld [vmem:[%s2] sm:$0x1]
    %v2058 = vlaneseq
    %v2059 = vshrl.u32 %v2058, 7
    %v2060 = vsub.s32 0, %v2059
    %v2061 = vrot.slane %v2056, %v2060
    %v2063 = vadd.f32 %v2040, %v2061
    %v2064 = vadd.f32 %v2041, %v2061
    %v2065 = vadd.f32 %v2042, %v2061
    %v2066 = vadd.f32 %v2043, %v2061
    %v2067 = vadd.f32 %v2044, %v2061
    %v2068 = vadd.f32 %v2045, %v2061
    %v2069 = vadd.f32 %v2046, %v2061
    %v2070 = vadd.f32 %v2047, %v2061
    %v2071 = vadd.f32 %v2048, %v2061
    %v2072 = vadd.f32 %v2049, %v2061
    %v2073 = vadd.f32 %v2050, %v2061
    %v2074 = vadd.f32 %v2051, %v2061
    %v2075 = vadd.f32 %v2052, %v2061
    %v2076 = vadd.f32 %v2053, %v2061
    %v2077 = vadd.f32 %v2054, %v2061
    %v2078 = vadd.f32 %v2055, %v2061
    %vm2079 = vcmask 261120
    %2080 = vst.msk [vmem:[#allocation2] sm:$0xff] %vm2079, %v2063
    %2081 = vst.msk [vmem:[#allocation2 + $0x8] sm:$0xff] %vm2079, %v2064
    %2082 = vst.msk [vmem:[#allocation2 + $0x10] sm:$0xff] %vm2079, %v2065
    %2083 = vst.msk [vmem:[#allocation2 + $0x18] sm:$0xff] %vm2079, %v2066
    %2084 = vst.msk [vmem:[#allocation2 + $0x20] sm:$0xff] %vm2079, %v2067
    %2085 = vst.msk [vmem:[#allocation2 + $0x28] sm:$0xff] %vm2079, %v2068
    %2086 = vst.msk [vmem:[#allocation2 + $0x30] sm:$0xff] %vm2079, %v2069
    %2087 = vst.msk [vmem:[#allocation2 + $0x38] sm:$0xff] %vm2079, %v2070
    %2088 = vst.msk [vmem:[#allocation2 + $0x40] sm:$0xff] %vm2079, %v2071
    %2089 = vst.msk [vmem:[#allocation2 + $0x48] sm:$0xff] %vm2079, %v2072
    %2090 = vst.msk [vmem:[#allocation2 + $0x50] sm:$0xff] %vm2079, %v2073
    %2091 = vst.msk [vmem:[#allocation2 + $0x58] sm:$0xff] %vm2079, %v2074
    %2092 = vst.msk [vmem:[#allocation2 + $0x60] sm:$0xff] %vm2079, %v2075
    %2093 = vst.msk [vmem:[#allocation2 + $0x68] sm:$0xff] %vm2079, %v2076
    %2094 = vst.msk [vmem:[#allocation2 + $0x70] sm:$0xff] %vm2079, %v2077
    %2095 = vst.msk [vmem:[#allocation2 + $0x78] sm:$0xff] %vm2079, %v2078
    // Predicated region
    $region14: #{mean_pool_conv.1} parent=1 // pred_check
      _
    $region15: #{mean_pool_conv.1} parent=1 // pred_check_branch
      %2097 = sbr.rel (0) target = $region17
    $region16: #{mean_pool_conv.1} parent=1 // pred_region
      %s2099 = ssub.s32 2048, 2048
      %2100 = vsyncadd [#allocation3], %s2099
      %s2101 = sshll.u32 [#allocation2], 4
      %s2102 = int_to_ptr.vmem [resolvable:$true] %s2101
      %2107 = dma.vmem_to_hbm [thread:$0]  %s2102, 2048, %s3, [#allocation3], 128, 128, 8
    $region17: #{mean_pool_conv.1} parent=1 // pred_fallthru
      _
    // Predicated region
    $region18: #{mean_pool_conv.1} parent=1 // pred_check
      _
    $region19: #{mean_pool_conv.1} parent=1 // pred_check_branch
      %2109 = sbr.rel (0) target = $region21
    $region20: #{mean_pool_conv.1} parent=1 // pred_region
      %2110 = dma.done [#allocation3], 2048
    $region21: #{mean_pool_conv.1} parent=1 // pred_fallthru
      _
    %2111 = vsyncpa [#allocation3], 1

</llo_original>
